<compile_context>
chip_gen: v5e
topology: v5e:2x2
jax: 0.10.0
libtpu: 0.0.40
codegen_flags: <defaults>
</compile_context>

<pallas_src>
import functools

import jax
import jax.numpy as jnp
from jax.experimental import pallas as pl
from jax.experimental.pallas import tpu as pltpu


def _conv1x1_kernel(w_ref, x_ref, o_ref, *, compute_dtype):
    # w_ref: (TN, Cin) weight-row tile (already in compute_dtype, e.g. bf16)
    # x_ref: (Cin, HW) channel-major activation slab (batch dim squeezed)
    # o_ref: (TN, HW) output tile
    x = x_ref[...]
    if x.dtype != compute_dtype:
        x = x.astype(compute_dtype)          # cast in-kernel -> both operands bf16
    o_ref[...] = jnp.dot(
        w_ref[...], x, preferred_element_type=jnp.float32
    ).astype(o_ref.dtype)


def conv2d_1x1(x_nchw: jax.Array, w_oihw: jax.Array, *, tn: int = 256,
               compute_dtype=jnp.bfloat16) -> jax.Array:
    """1x1 conv, stride 1, no bias. x_nchw: (N, Cin, H, W); w_oihw: (Cout, Cin, 1, 1)."""
    N, Cin, H, W = x_nchw.shape
    Cout, Cin_w, kh, kw = w_oihw.shape
    assert (Cin_w, kh, kw) == (Cin, 1, 1)
    assert Cout % tn == 0
    HW = H * W

    # Channel-major layout: both reshapes are free (no data movement) for
    # contiguous NCHW / OIHW tensors.
    x_cm = x_nchw.reshape(N, Cin, HW)                    # (N, Cin, HW)
    w_mat = w_oihw.reshape(Cout, Cin).astype(compute_dtype)  # (Cout, Cin), bf16 stream

    x_item = jnp.dtype(x_nchw.dtype).itemsize
    w_item = jnp.dtype(w_mat.dtype).itemsize
    cost = pl.CostEstimate(
        flops=2 * N * HW * Cin * Cout,
        transcendentals=0,
        bytes_accessed=(N * Cin * HW * x_item        # X streamed as f32, cast in-kernel
                        + Cout * Cin * w_item        # W streamed as bf16
                        + N * Cout * HW * x_item),   # out written as f32
    )

    kernel = functools.partial(_conv1x1_kernel, compute_dtype=compute_dtype)

    out_cm = pl.pallas_call(
        kernel,
        out_shape=jax.ShapeDtypeStruct((N, Cout, HW), x_nchw.dtype),
        grid_spec=pltpu.PrefetchScalarGridSpec(
            num_scalar_prefetch=0,
            grid=(N, Cout // tn),                         # (1, 2) for this module
            in_specs=[
                # Weight Cout tile (the only block that changes across j).
                pl.BlockSpec((tn, Cin), lambda n, j: (j, 0)),
                # Full channel-major X slab for batch item n; batch dim squeezed
                # out of the kernel ref (block index constant across j -> no re-DMA).
                pl.BlockSpec((None, Cin, HW), lambda n, j: (n, 0, 0)),
            ],
            out_specs=pl.BlockSpec((None, tn, HW), lambda n, j: (n, j, 0)),
        ),
        compiler_params=pltpu.CompilerParams(
            # Both axes independent -> megacore can shard the two Cout tiles
            # across the two v7x TensorCores.
            dimension_semantics=("parallel", "parallel"),
        ),
        cost_estimate=cost,
    )(w_mat, x_cm)

    # Free reshape back to NCHW.
    return out_cm.reshape(N, Cout, H, W)


if __name__ == "__main__":
    # Shapes implied by the module: x210 = randn([1, 1024, 14, 14]); Conv2d(1024, 512, 1x1)
    N, Cin, H, W = 1, 1024, 14, 14
    Cout = 512

    key = jax.random.PRNGKey(0)
    kx, kw = jax.random.split(key)
    x = jax.random.normal(kx, (N, Cin, H, W), dtype=jnp.float32)
    # Deterministic kaiming-ish init for the conv weight (fan_in = Cin * 1 * 1)
    w = jax.random.normal(kw, (Cout, Cin, 1, 1), dtype=jnp.float32) * (1.0 / jnp.sqrt(Cin))

    y = conv2d_1x1(x, w)
    y = jax.block_until_ready(y)
    assert y.shape == (N, Cout, H, W), y.shape

    # Reference with matching bf16 input rounding (products are exact in f32,
    # accumulation in f32) -> tight comparison is valid for the bf16 MXU path.
    w_bf = w.reshape(Cout, Cin).astype(jnp.bfloat16).astype(jnp.float32)
    x_bf = x.astype(jnp.bfloat16).astype(jnp.float32)
    y_ref = jnp.einsum("oi,nihw->nohw", w_bf, x_bf)
    assert jnp.allclose(y, y_ref, atol=2e-3, rtol=2e-3)

    # Coarse sanity check against the pure-f32 reference (bf16 rounding noise only).
    y_ref_f32 = jnp.einsum("oi,nihw->nohw", w.reshape(Cout, Cin), x)
    assert jnp.allclose(y, y_ref_f32, atol=1e-1, rtol=1e-1)

    print("KERNEL_OK")
</pallas_src>

<mosaic_0001>
module attributes {stable_mosaic.version = 11 : i64} {
  func.func @_conv1x1_kernel(%arg0: i32, %arg1: i32, %arg2: memref<256x1024xbf16, #tpu.memory_space<vmem>>, %arg3: memref<1x1024x196xf32, #tpu.memory_space<vmem>>, %arg4: memref<1x256x196xf32, #tpu.memory_space<vmem>>) attributes {dimension_semantics = [#tpu.dimension_semantics<parallel>, #tpu.dimension_semantics<parallel>], iteration_bounds = array<i64: 1, 2>, scalar_prefetch = 0 : i64, scratch_operands = 0 : i64, tpu.core_type = #tpu.core_type<tc>, window_params = [{transform_indices = @transform_0, window_bounds = array<i64: 256, 1024>}, {transform_indices = @transform_1, window_bounds = array<i64: 1, 1024, 196>}, {transform_indices = @transform_2, window_bounds = array<i64: 1, 256, 196>}]} {
    %c0 = arith.constant 0 : index
    %c0_0 = arith.constant 0 : index
    %c0_1 = arith.constant 0 : index
    %0 = vector.load %arg3[%c0, %c0_0, %c0_1] : memref<1x1024x196xf32, #tpu.memory_space<vmem>>, vector<1x1024x196xf32>
    %1 = vector.shape_cast %0 : vector<1x1024x196xf32> to vector<1024x196xf32>
    %2 = arith.truncf %1 : vector<1024x196xf32> to vector<1024x196xbf16>
    %c0_2 = arith.constant 0 : index
    %c0_3 = arith.constant 0 : index
    %3 = vector.load %arg2[%c0_2, %c0_3] : memref<256x1024xbf16, #tpu.memory_space<vmem>>, vector<256x1024xbf16>
    %cst = arith.constant dense<0.000000e+00> : vector<256x196xf32>
    %4 = tpu.matmul %3, %2, %cst {dimension_numbers = #tpu.dot_dimension_numbers<[1], [0], [0], [1], [0, 0, 1, 1], [], []>} : vector<256x1024xbf16>, vector<1024x196xbf16>, vector<256x196xf32> -> vector<256x196xf32>
    %c0_4 = arith.constant 0 : index
    %c0_5 = arith.constant 0 : index
    %c0_6 = arith.constant 0 : index
    %5 = vector.load %arg4[%c0_4, %c0_5, %c0_6] : memref<1x256x196xf32, #tpu.memory_space<vmem>>, vector<1x256x196xf32>
    %6 = vector.shape_cast %5 : vector<1x256x196xf32> to vector<256x196xf32>
    %7 = vector.shape_cast %4 : vector<256x196xf32> to vector<1x256x196xf32>
    tpu.vector_store %arg4[%c0_4, %c0_5, %c0_6], %7 {strides = array<i32>} : memref<1x256x196xf32, #tpu.memory_space<vmem>>, vector<1x256x196xf32>,
    return
  }
  func.func @transform_0(%arg0: i32, %arg1: i32) -> (i32, i32) {
    %c0_i32 = arith.constant 0 : i32
    %c0_i32_0 = arith.constant 0 : i32
    return %arg1, %c0_i32 : i32, i32
  }
  func.func @transform_1(%arg0: i32, %arg1: i32) -> (i32, i32, i32) {
    %c0_i32 = arith.constant 0 : i32
    %c0_i32_0 = arith.constant 0 : i32
    %c0_i32_1 = arith.constant 0 : i32
    return %arg0, %c0_i32, %c0_i32_0 : i32, i32, i32
  }
  func.func @transform_2(%arg0: i32, %arg1: i32) -> (i32, i32, i32) {
    %c0_i32 = arith.constant 0 : i32
    %c0_i32_0 = arith.constant 0 : i32
    return %arg0, %arg1, %c0_i32 : i32, i32, i32
  }
}

</mosaic_0001>

<llo_original>
// kernel: tpu_custom_call.1
$region0: #{tpu_custom_call.1}
  #allocation0 [shape = 'u32[]', space=smem, size = 0x4, offset = 0x4, fixed_abs, tag = 'smem constant byte address 0x4 - core index']
  #allocation1 [shape = 'u32[72,128]{1,0:T(1,128)}', space=vmem, size = 0x9000, scoped, tag = 'internal scratch']
  %s0 = inlined_call_operand.vmem [shape: bf16[512,1024], index: 0, kind: input, shape index: {}]
  %s1 = inlined_call_operand.vmem [shape: f32[1,1024,196], index: 1, kind: input, shape index: {}]
  %s2 = inlined_call_operand.vmem [shape: f32[1,512,196], index: 2, kind: output, shape index: {}]
  %s3 = sld [smem:[#allocation0]]
  $region41: #{tpu_custom_call.1} parent=0
    _
  %s5 = ssub.s32 1, %s3
  %s6 = scalar_select 0, %s5, %s3
  loop: start=0, step=1, limit=4
  $region2: #{tpu_custom_call.1} parent=0 // loop_pre_header
    _
  $region3: #{tpu_custom_call.1} parent=0 // loop_header
    %s8 = sphi 0, %s12
    %p9 = scmp.ge.s32.totalorder %s8, 4
    %s15 = sphi 0, %s27
    %s16 = sphi 0, %s23
    %s17 = sphi 0, %s15
    %s18 = sphi 0, %s16
    %s19 = sphi 0, %s17
    %s20 = sphi 0, %s18
    %s30 = sphi 0, %s32
    %s33 = sphi 0, %s30
    %s34 = sphi 0, %s33
    %s50 = sphi 0, %s34
    %s56 = sphi 0, %s58
    %s59 = sphi 0, %s56
    %s60 = sphi 0, %s59
    %s76 = sphi 0, %s60
    %s84 = sphi 0, %s86
    %s87 = sphi 0, %s84
    %s88 = sphi 0, %s87
    %s104 = sphi 0, %s88
  $region4: #{tpu_custom_call.1} parent=0 // loop_header_branch
    %11 = sbr.rel (%p9) target = $region8
  $region5: #{tpu_custom_call.1} parent=0 // loop_body
    %s13 = ssub.s32 %s8, 1
    %s14 = ssub.s32 %s8, 2
    %s21 = sadd.s32 1, %s16
    %p22 = scmp.ge.s32.totalorder %s21, 2
    %s23 = scalar_select %p22, 0, %s21
    %s24 = sadd.s32 1, %s15
    %s25 = scalar_select %p22, %s24, %s15
    %p26 = scmp.ge.s32.totalorder %s25, 1
    %s27 = scalar_select %p26, 0, %s25
    %s28 = ssub.s32 %s16, %s23
    %p29 = scmp.eq.s32.totalorder %s28, 0
    %s31 = sadd.s32 %s30, 1
    %s32 = scalar_select %p29, %s30, %s31
    %p35 = pneg %p29
    %p36 = scmp.eq.s32.totalorder %s8, 1
    %p37 = por %p35, %p36
    %p38 = scmp.ne.s32.totalorder %s30, %s33
    %p39 = scmp.eq.s32.totalorder %s8, 0
    %p40 = por %p38, %p39
    %p41 = scmp.ne.s32.totalorder %s30, %s33
    %p42 = scmp.eq.s32.totalorder %s13, 1
    %p43 = por %p41, %p42
    %p44 = scmp.ne.s32.totalorder %s33, %s34
    %p45 = scmp.eq.s32.totalorder %s13, 0
    %p46 = por %p44, %p45
    %p47 = scmp.ne.s32.totalorder %s33, %s34
    %p48 = scmp.eq.s32.totalorder %s14, 1
    %p49 = por %p47, %p48
    %p51 = scmp.ne.s32.totalorder %s34, %s50
    %p52 = scmp.eq.s32.totalorder %s14, 0
    %p53 = por %p51, %p52
    %s54 = ssub.s32 %s15, %s27
    %p55 = scmp.eq.s32.totalorder %s54, 0
    %s57 = sadd.s32 %s56, 1
    %s58 = scalar_select %p55, %s56, %s57
    %p61 = pneg %p55
    %p62 = scmp.eq.s32.totalorder %s8, 1
    %p63 = por %p61, %p62
    %p64 = scmp.ne.s32.totalorder %s56, %s59
    %p65 = scmp.eq.s32.totalorder %s8, 0
    %p66 = por %p64, %p65
    %p67 = scmp.ne.s32.totalorder %s56, %s59
    %p68 = scmp.eq.s32.totalorder %s13, 1
    %p69 = por %p67, %p68
    %p70 = scmp.ne.s32.totalorder %s59, %s60
    %p71 = scmp.eq.s32.totalorder %s13, 0
    %p72 = por %p70, %p71
    %p73 = scmp.ne.s32.totalorder %s59, %s60
    %p74 = scmp.eq.s32.totalorder %s14, 1
    %p75 = por %p73, %p74
    %p77 = scmp.ne.s32.totalorder %s60, %s76
    %p78 = scmp.eq.s32.totalorder %s14, 0
    %p79 = por %p77, %p78
    %s80 = ssub.s32 %s15, %s27
    %s81 = ssub.s32 %s16, %s23
    %s82 = sor.u32 %s80, %s81
    %p83 = scmp.eq.s32.totalorder %s82, 0
    %s85 = sadd.s32 %s84, 1
    %s86 = scalar_select %p83, %s84, %s85
    %p89 = pneg %p83
    %p90 = scmp.eq.s32.totalorder %s8, 1
    %p91 = por %p89, %p90
    %p92 = scmp.ne.s32.totalorder %s84, %s87
    %p93 = scmp.eq.s32.totalorder %s8, 0
    %p94 = por %p92, %p93
    %p95 = scmp.ne.s32.totalorder %s84, %s87
    %p96 = scmp.eq.s32.totalorder %s13, 1
    %p97 = por %p95, %p96
    %p98 = scmp.ne.s32.totalorder %s87, %s88
    %p99 = scmp.eq.s32.totalorder %s13, 0
    %p100 = por %p98, %p99
    %p101 = scmp.ne.s32.totalorder %s87, %s88
    %p102 = scmp.eq.s32.totalorder %s14, 1
    %p103 = por %p101, %p102
    %p105 = scmp.ne.s32.totalorder %s88, %s104
    %p106 = scmp.eq.s32.totalorder %s14, 0
    %p107 = por %p105, %p106
    %p108 = scmp.le.s32.totalorder 1, %s8
    %p109 = scmp.lt.s32.totalorder %s8, 3
    %p110 = pnand %p108, %p109
    %p111 = pneg %p110
    // Predicated region
    $region9: #{tpu_custom_call.1} parent=5 // pred_check
      _
    $region10: #{tpu_custom_call.1} parent=5 // pred_check_branch
      %113 = sbr.rel (%p110) target = $region12
    $region11: #{tpu_custom_call.1} parent=5 // pred_region
      %s114 = ssub.s32 %s8, 1
      // Predicated region
      $region13: #{tpu_custom_call.1} parent=11 // pred_check
        %p115 = pneg %p72
      $region14: #{tpu_custom_call.1} parent=11 // pred_check_branch
        %117 = sbr.rel (%p115) target = $region16
      $region15: #{tpu_custom_call.1} parent=11 // pred_region
        %p118 = scmp.lt.s32.totalorder %s17, 0
        %s119 = scalar_select %p118, %s17, 0
        %s120 = smul.addr %s119, 256
        %s121 = smul.addr %s120, 8
        %s122 = scalar_lea.vmem %s1, %s121
      $region16: #{tpu_custom_call.1} parent=11 // pred_fallthru
        _
    $region12: #{tpu_custom_call.1} parent=5 // pred_fallthru
      _
    %p123 = scmp.lt.s32.totalorder %s8, 2
    // Predicated region
    $region17: #{tpu_custom_call.1} parent=5 // pred_check
      %p124 = pneg %p123
    $region18: #{tpu_custom_call.1} parent=5 // pred_check_branch
      %126 = sbr.rel (%p124) target = $region20
    $region19: #{tpu_custom_call.1} parent=5 // pred_region
      // Predicated region
      $region21: #{tpu_custom_call.1} parent=19 // pred_check
        %p127 = pneg %p40
      $region22: #{tpu_custom_call.1} parent=19 // pred_check_branch
        %129 = sbr.rel (%p127) target = $region24
      $region23: #{tpu_custom_call.1} parent=19 // pred_region
        %s130 = smul.u32 32, %s16
        %p131 = scmp.lt.s32.totalorder %s130, 63
        %s132 = scalar_select %p131, %s130, 63
        %s133 = smul.addr %s132, 8
        %s134 = smul.addr %s133, 4
        %s135 = scalar_lea.vmem %s0, %s134
        %s136 = smul.u32 32, %s16
      $region24: #{tpu_custom_call.1} parent=19 // pred_fallthru
        _
    $region20: #{tpu_custom_call.1} parent=5 // pred_fallthru
      _
    %p137 = scmp.le.s32.totalorder 1, %s8
    %p138 = scmp.lt.s32.totalorder %s8, 3
    %p139 = pnand %p137, %p138
    %p140 = pneg %p139
    // Predicated region
    $region25: #{tpu_custom_call.1} parent=5 // pred_check
      _
    $region26: #{tpu_custom_call.1} parent=5 // pred_check_branch
      %142 = sbr.rel (%p139) target = $region28
    $region27: #{tpu_custom_call.1} parent=5 // pred_region
      %s143 = ssub.s32 %s8, 1
      %s144 = smul.u32 32, %s18
      %p145 = scmp.lt.s32.totalorder %s144, 63
      %s146 = scalar_select %p145, %s144, 63
      %s147 = smul.addr %s146, 8
      %s148 = smul.addr %s147, 4
      %s149 = scalar_lea.vmem %s0, %s148
      %p150 = pneg %p46
      %p151 = pneg %p43
      %p152 = scmp.lt.s32.totalorder %s17, 0
      %s153 = scalar_select %p152, %s17, 0
      %s154 = smul.addr %s153, 256
      %s155 = smul.addr %s154, 8
      %s156 = scalar_lea.vmem %s1, %s155
      %p157 = pneg %p72
      %p158 = pneg %p69
      %p159 = pneg %p100
      %p160 = pneg %p97
      %s161 = smul.u32 32, %s18
      %p162 = scmp.lt.s32.totalorder %s17, 0
      %s163 = scalar_select %p162, %s17, 0
      %p164 = scmp.lt.s32.totalorder %s161, 63
      %s165 = scalar_select %p164, %s161, 63
      %s166 = smul.addr %s165, 2
      %s167 = smul.addr %s163, 128
      %s168 = sadd.s32 %s166, %s167
      %s169 = smul.addr %s168, 8
      %s170 = scalar_lea.vmem %s2, %s169
      %s171 = smul.u32 32, %s18
      %p172 = scmp.lt.s32.totalorder %s171, 63
      %s173 = scalar_select %p172, %s171, 63
      %s174 = smul.addr %s173, 8
      %s175 = smul.addr %s174, 4
      %s176 = scalar_lea.vmem %s0, %s175
      %s177 = smul.u32 32, %s18
      %p178 = scmp.lt.s32.totalorder %s17, 0
      %s179 = scalar_select %p178, %s17, 0
      %s180 = smul.addr %s179, 256
      %s181 = smul.addr %s180, 8
      %s182 = scalar_lea.vmem %s1, %s181
      %s183 = smul.u32 32, %s18
      %p184 = scmp.lt.s32.totalorder %s17, 0
      %s185 = scalar_select %p184, %s17, 0
      %p186 = scmp.lt.s32.totalorder %s183, 63
      %s187 = scalar_select %p186, %s183, 63
      %s188 = smul.addr %s187, 2
      %s189 = smul.addr %s185, 128
      %s190 = sadd.s32 %s188, %s189
      %s191 = smul.addr %s190, 8
      %s192 = scalar_lea.vmem %s2, %s191
      %s193 = smul.u32 32, %s18
      %v194 = vld [vmem:[%s182] sm:$0xff]
      %v195 = vld [vmem:[%s182 + $0x8] sm:$0xff]
      %v196 = vld [vmem:[%s182 + $0x10] sm:$0xff]
      %v197 = vld [vmem:[%s182 + $0x18] sm:$0xff]
      %v198 = vld [vmem:[%s182 + $0x20] sm:$0xff]
      %v199 = vld [vmem:[%s182 + $0x28] sm:$0xff]
      %v200 = vld [vmem:[%s182 + $0x30] sm:$0xff]
      %v201 = vld [vmem:[%s182 + $0x38] sm:$0xff]
      %v202 = vld [vmem:[%s182 + $0x40] sm:$0xff]
      %v203 = vld [vmem:[%s182 + $0x48] sm:$0xff]
      %v204 = vld [vmem:[%s182 + $0x50] sm:$0xff]
      %v205 = vld [vmem:[%s182 + $0x58] sm:$0xff]
      %v206 = vld [vmem:[%s182 + $0x60] sm:$0xff]
      %v207 = vld [vmem:[%s182 + $0x68] sm:$0xff]
      %v208 = vld [vmem:[%s182 + $0x70] sm:$0xff]
      %v209 = vld [vmem:[%s182 + $0x78] sm:$0xff]
      %v210 = vld [vmem:[%s182 + $0x80] sm:$0xff]
      %v211 = vld [vmem:[%s182 + $0x88] sm:$0xff]
      %v212 = vld [vmem:[%s182 + $0x90] sm:$0xff]
      %v213 = vld [vmem:[%s182 + $0x98] sm:$0xff]
      %v214 = vld [vmem:[%s182 + $0xa0] sm:$0xff]
      %v215 = vld [vmem:[%s182 + $0xa8] sm:$0xff]
      %v216 = vld [vmem:[%s182 + $0xb0] sm:$0xff]
      %v217 = vld [vmem:[%s182 + $0xb8] sm:$0xff]
      %v218 = vld [vmem:[%s182 + $0xc0] sm:$0xff]
      %v219 = vld [vmem:[%s182 + $0xc8] sm:$0xff]
      %v220 = vld [vmem:[%s182 + $0xd0] sm:$0xff]
      %v221 = vld [vmem:[%s182 + $0xd8] sm:$0xff]
      %v222 = vld [vmem:[%s182 + $0xe0] sm:$0xff]
      %v223 = vld [vmem:[%s182 + $0xe8] sm:$0xff]
      %v224 = vld [vmem:[%s182 + $0xf0] sm:$0xff]
      %v225 = vld [vmem:[%s182 + $0xf8] sm:$0xff]
      %v226 = vld [vmem:[%s182 + $0x100] sm:$0xff]
      %v227 = vld [vmem:[%s182 + $0x108] sm:$0xff]
      %v228 = vld [vmem:[%s182 + $0x110] sm:$0xff]
      %v229 = vld [vmem:[%s182 + $0x118] sm:$0xff]
      %v230 = vld [vmem:[%s182 + $0x120] sm:$0xff]
      %v231 = vld [vmem:[%s182 + $0x128] sm:$0xff]
      %v232 = vld [vmem:[%s182 + $0x130] sm:$0xff]
      %v233 = vld [vmem:[%s182 + $0x138] sm:$0xff]
      %v234 = vld [vmem:[%s182 + $0x140] sm:$0xff]
      %v235 = vld [vmem:[%s182 + $0x148] sm:$0xff]
      %v236 = vld [vmem:[%s182 + $0x150] sm:$0xff]
      %v237 = vld [vmem:[%s182 + $0x158] sm:$0xff]
      %v238 = vld [vmem:[%s182 + $0x160] sm:$0xff]
      %v239 = vld [vmem:[%s182 + $0x168] sm:$0xff]
      %v240 = vld [vmem:[%s182 + $0x170] sm:$0xff]
      %v241 = vld [vmem:[%s182 + $0x178] sm:$0xff]
      %v242 = vld [vmem:[%s182 + $0x180] sm:$0xff]
      %v243 = vld [vmem:[%s182 + $0x188] sm:$0xff]
      %v244 = vld [vmem:[%s182 + $0x190] sm:$0xff]
      %v245 = vld [vmem:[%s182 + $0x198] sm:$0xff]
      %v246 = vld [vmem:[%s182 + $0x1a0] sm:$0xff]
      %v247 = vld [vmem:[%s182 + $0x1a8] sm:$0xff]
      %v248 = vld [vmem:[%s182 + $0x1b0] sm:$0xff]
      %v249 = vld [vmem:[%s182 + $0x1b8] sm:$0xff]
      %v250 = vld [vmem:[%s182 + $0x1c0] sm:$0xff]
      %v251 = vld [vmem:[%s182 + $0x1c8] sm:$0xff]
      %v252 = vld [vmem:[%s182 + $0x1d0] sm:$0xff]
      %v253 = vld [vmem:[%s182 + $0x1d8] sm:$0xff]
      %v254 = vld [vmem:[%s182 + $0x1e0] sm:$0xff]
      %v255 = vld [vmem:[%s182 + $0x1e8] sm:$0xff]
      %v256 = vld [vmem:[%s182 + $0x1f0] sm:$0xff]
      %v257 = vld [vmem:[%s182 + $0x1f8] sm:$0xff]
      %v258 = vld [vmem:[%s182 + $0x200] sm:$0xff]
      %v259 = vld [vmem:[%s182 + $0x208] sm:$0xff]
      %v260 = vld [vmem:[%s182 + $0x210] sm:$0xff]
      %v261 = vld [vmem:[%s182 + $0x218] sm:$0xff]
      %v262 = vld [vmem:[%s182 + $0x220] sm:$0xff]
      %v263 = vld [vmem:[%s182 + $0x228] sm:$0xff]
      %v264 = vld [vmem:[%s182 + $0x230] sm:$0xff]
      %v265 = vld [vmem:[%s182 + $0x238] sm:$0xff]
      %v266 = vld [vmem:[%s182 + $0x240] sm:$0xff]
      %v267 = vld [vmem:[%s182 + $0x248] sm:$0xff]
      %v268 = vld [vmem:[%s182 + $0x250] sm:$0xff]
      %v269 = vld [vmem:[%s182 + $0x258] sm:$0xff]
      %v270 = vld [vmem:[%s182 + $0x260] sm:$0xff]
      %v271 = vld [vmem:[%s182 + $0x268] sm:$0xff]
      %v272 = vld [vmem:[%s182 + $0x270] sm:$0xff]
      %v273 = vld [vmem:[%s182 + $0x278] sm:$0xff]
      %v274 = vld [vmem:[%s182 + $0x280] sm:$0xff]
      %v275 = vld [vmem:[%s182 + $0x288] sm:$0xff]
      %v276 = vld [vmem:[%s182 + $0x290] sm:$0xff]
      %v277 = vld [vmem:[%s182 + $0x298] sm:$0xff]
      %v278 = vld [vmem:[%s182 + $0x2a0] sm:$0xff]
      %v279 = vld [vmem:[%s182 + $0x2a8] sm:$0xff]
      %v280 = vld [vmem:[%s182 + $0x2b0] sm:$0xff]
      %v281 = vld [vmem:[%s182 + $0x2b8] sm:$0xff]
      %v282 = vld [vmem:[%s182 + $0x2c0] sm:$0xff]
      %v283 = vld [vmem:[%s182 + $0x2c8] sm:$0xff]
      %v284 = vld [vmem:[%s182 + $0x2d0] sm:$0xff]
      %v285 = vld [vmem:[%s182 + $0x2d8] sm:$0xff]
      %v286 = vld [vmem:[%s182 + $0x2e0] sm:$0xff]
      %v287 = vld [vmem:[%s182 + $0x2e8] sm:$0xff]
      %v288 = vld [vmem:[%s182 + $0x2f0] sm:$0xff]
      %v289 = vld [vmem:[%s182 + $0x2f8] sm:$0xff]
      %v290 = vld [vmem:[%s182 + $0x300] sm:$0xff]
      %v291 = vld [vmem:[%s182 + $0x308] sm:$0xff]
      %v292 = vld [vmem:[%s182 + $0x310] sm:$0xff]
      %v293 = vld [vmem:[%s182 + $0x318] sm:$0xff]
      %v294 = vld [vmem:[%s182 + $0x320] sm:$0xff]
      %v295 = vld [vmem:[%s182 + $0x328] sm:$0xff]
      %v296 = vld [vmem:[%s182 + $0x330] sm:$0xff]
      %v297 = vld [vmem:[%s182 + $0x338] sm:$0xff]
      %v298 = vld [vmem:[%s182 + $0x340] sm:$0xff]
      %v299 = vld [vmem:[%s182 + $0x348] sm:$0xff]
      %v300 = vld [vmem:[%s182 + $0x350] sm:$0xff]
      %v301 = vld [vmem:[%s182 + $0x358] sm:$0xff]
      %v302 = vld [vmem:[%s182 + $0x360] sm:$0xff]
      %v303 = vld [vmem:[%s182 + $0x368] sm:$0xff]
      %v304 = vld [vmem:[%s182 + $0x370] sm:$0xff]
      %v305 = vld [vmem:[%s182 + $0x378] sm:$0xff]
      %v306 = vld [vmem:[%s182 + $0x380] sm:$0xff]
      %v307 = vld [vmem:[%s182 + $0x388] sm:$0xff]
      %v308 = vld [vmem:[%s182 + $0x390] sm:$0xff]
      %v309 = vld [vmem:[%s182 + $0x398] sm:$0xff]
      %v310 = vld [vmem:[%s182 + $0x3a0] sm:$0xff]
      %v311 = vld [vmem:[%s182 + $0x3a8] sm:$0xff]
      %v312 = vld [vmem:[%s182 + $0x3b0] sm:$0xff]
      %v313 = vld [vmem:[%s182 + $0x3b8] sm:$0xff]
      %v314 = vld [vmem:[%s182 + $0x3c0] sm:$0xff]
      %v315 = vld [vmem:[%s182 + $0x3c8] sm:$0xff]
      %v316 = vld [vmem:[%s182 + $0x3d0] sm:$0xff]
      %v317 = vld [vmem:[%s182 + $0x3d8] sm:$0xff]
      %v318 = vld [vmem:[%s182 + $0x3e0] sm:$0xff]
      %v319 = vld [vmem:[%s182 + $0x3e8] sm:$0xff]
      %v320 = vld [vmem:[%s182 + $0x3f0] sm:$0xff]
      %v321 = vld [vmem:[%s182 + $0x3f8] sm:$0xff]
      %v322 = vld [vmem:[%s182 + $0x400] sm:$0xff]
      %v323 = vld [vmem:[%s182 + $0x408] sm:$0xff]
      %v324 = vld [vmem:[%s182 + $0x410] sm:$0xff]
      %v325 = vld [vmem:[%s182 + $0x418] sm:$0xff]
      %v326 = vld [vmem:[%s182 + $0x420] sm:$0xff]
      %v327 = vld [vmem:[%s182 + $0x428] sm:$0xff]
      %v328 = vld [vmem:[%s182 + $0x430] sm:$0xff]
      %v329 = vld [vmem:[%s182 + $0x438] sm:$0xff]
      %v330 = vld [vmem:[%s182 + $0x440] sm:$0xff]
      %v331 = vld [vmem:[%s182 + $0x448] sm:$0xff]
      %v332 = vld [vmem:[%s182 + $0x450] sm:$0xff]
      %v333 = vld [vmem:[%s182 + $0x458] sm:$0xff]
      %v334 = vld [vmem:[%s182 + $0x460] sm:$0xff]
      %v335 = vld [vmem:[%s182 + $0x468] sm:$0xff]
      %v336 = vld [vmem:[%s182 + $0x470] sm:$0xff]
      %v337 = vld [vmem:[%s182 + $0x478] sm:$0xff]
      %v338 = vld [vmem:[%s182 + $0x480] sm:$0xff]
      %v339 = vld [vmem:[%s182 + $0x488] sm:$0xff]
      %v340 = vld [vmem:[%s182 + $0x490] sm:$0xff]
      %v341 = vld [vmem:[%s182 + $0x498] sm:$0xff]
      %v342 = vld [vmem:[%s182 + $0x4a0] sm:$0xff]
      %v343 = vld [vmem:[%s182 + $0x4a8] sm:$0xff]
      %v344 = vld [vmem:[%s182 + $0x4b0] sm:$0xff]
      %v345 = vld [vmem:[%s182 + $0x4b8] sm:$0xff]
      %v346 = vld [vmem:[%s182 + $0x4c0] sm:$0xff]
      %v347 = vld [vmem:[%s182 + $0x4c8] sm:$0xff]
      %v348 = vld [vmem:[%s182 + $0x4d0] sm:$0xff]
      %v349 = vld [vmem:[%s182 + $0x4d8] sm:$0xff]
      %v350 = vld [vmem:[%s182 + $0x4e0] sm:$0xff]
      %v351 = vld [vmem:[%s182 + $0x4e8] sm:$0xff]
      %v352 = vld [vmem:[%s182 + $0x4f0] sm:$0xff]
      %v353 = vld [vmem:[%s182 + $0x4f8] sm:$0xff]
      %v354 = vld [vmem:[%s182 + $0x500] sm:$0xff]
      %v355 = vld [vmem:[%s182 + $0x508] sm:$0xff]
      %v356 = vld [vmem:[%s182 + $0x510] sm:$0xff]
      %v357 = vld [vmem:[%s182 + $0x518] sm:$0xff]
      %v358 = vld [vmem:[%s182 + $0x520] sm:$0xff]
      %v359 = vld [vmem:[%s182 + $0x528] sm:$0xff]
      %v360 = vld [vmem:[%s182 + $0x530] sm:$0xff]
      %v361 = vld [vmem:[%s182 + $0x538] sm:$0xff]
      %v362 = vld [vmem:[%s182 + $0x540] sm:$0xff]
      %v363 = vld [vmem:[%s182 + $0x548] sm:$0xff]
      %v364 = vld [vmem:[%s182 + $0x550] sm:$0xff]
      %v365 = vld [vmem:[%s182 + $0x558] sm:$0xff]
      %v366 = vld [vmem:[%s182 + $0x560] sm:$0xff]
      %v367 = vld [vmem:[%s182 + $0x568] sm:$0xff]
      %v368 = vld [vmem:[%s182 + $0x570] sm:$0xff]
      %v369 = vld [vmem:[%s182 + $0x578] sm:$0xff]
      %v370 = vld [vmem:[%s182 + $0x580] sm:$0xff]
      %v371 = vld [vmem:[%s182 + $0x588] sm:$0xff]
      %v372 = vld [vmem:[%s182 + $0x590] sm:$0xff]
      %v373 = vld [vmem:[%s182 + $0x598] sm:$0xff]
      %v374 = vld [vmem:[%s182 + $0x5a0] sm:$0xff]
      %v375 = vld [vmem:[%s182 + $0x5a8] sm:$0xff]
      %v376 = vld [vmem:[%s182 + $0x5b0] sm:$0xff]
      %v377 = vld [vmem:[%s182 + $0x5b8] sm:$0xff]
      %v378 = vld [vmem:[%s182 + $0x5c0] sm:$0xff]
      %v379 = vld [vmem:[%s182 + $0x5c8] sm:$0xff]
      %v380 = vld [vmem:[%s182 + $0x5d0] sm:$0xff]
      %v381 = vld [vmem:[%s182 + $0x5d8] sm:$0xff]
      %v382 = vld [vmem:[%s182 + $0x5e0] sm:$0xff]
      %v383 = vld [vmem:[%s182 + $0x5e8] sm:$0xff]
      %v384 = vld [vmem:[%s182 + $0x5f0] sm:$0xff]
      %v385 = vld [vmem:[%s182 + $0x5f8] sm:$0xff]
      %v386 = vld [vmem:[%s182 + $0x600] sm:$0xff]
      %v387 = vld [vmem:[%s182 + $0x608] sm:$0xff]
      %v388 = vld [vmem:[%s182 + $0x610] sm:$0xff]
      %v389 = vld [vmem:[%s182 + $0x618] sm:$0xff]
      %v390 = vld [vmem:[%s182 + $0x620] sm:$0xff]
      %v391 = vld [vmem:[%s182 + $0x628] sm:$0xff]
      %v392 = vld [vmem:[%s182 + $0x630] sm:$0xff]
      %v393 = vld [vmem:[%s182 + $0x638] sm:$0xff]
      %v394 = vld [vmem:[%s182 + $0x640] sm:$0xff]
      %v395 = vld [vmem:[%s182 + $0x648] sm:$0xff]
      %v396 = vld [vmem:[%s182 + $0x650] sm:$0xff]
      %v397 = vld [vmem:[%s182 + $0x658] sm:$0xff]
      %v398 = vld [vmem:[%s182 + $0x660] sm:$0xff]
      %v399 = vld [vmem:[%s182 + $0x668] sm:$0xff]
      %v400 = vld [vmem:[%s182 + $0x670] sm:$0xff]
      %v401 = vld [vmem:[%s182 + $0x678] sm:$0xff]
      %v402 = vld [vmem:[%s182 + $0x680] sm:$0xff]
      %v403 = vld [vmem:[%s182 + $0x688] sm:$0xff]
      %v404 = vld [vmem:[%s182 + $0x690] sm:$0xff]
      %v405 = vld [vmem:[%s182 + $0x698] sm:$0xff]
      %v406 = vld [vmem:[%s182 + $0x6a0] sm:$0xff]
      %v407 = vld [vmem:[%s182 + $0x6a8] sm:$0xff]
      %v408 = vld [vmem:[%s182 + $0x6b0] sm:$0xff]
      %v409 = vld [vmem:[%s182 + $0x6b8] sm:$0xff]
      %v410 = vld [vmem:[%s182 + $0x6c0] sm:$0xff]
      %v411 = vld [vmem:[%s182 + $0x6c8] sm:$0xff]
      %v412 = vld [vmem:[%s182 + $0x6d0] sm:$0xff]
      %v413 = vld [vmem:[%s182 + $0x6d8] sm:$0xff]
      %v414 = vld [vmem:[%s182 + $0x6e0] sm:$0xff]
      %v415 = vld [vmem:[%s182 + $0x6e8] sm:$0xff]
      %v416 = vld [vmem:[%s182 + $0x6f0] sm:$0xff]
      %v417 = vld [vmem:[%s182 + $0x6f8] sm:$0xff]
      %v418 = vld [vmem:[%s182 + $0x700] sm:$0xff]
      %v419 = vld [vmem:[%s182 + $0x708] sm:$0xff]
      %v420 = vld [vmem:[%s182 + $0x710] sm:$0xff]
      %v421 = vld [vmem:[%s182 + $0x718] sm:$0xff]
      %v422 = vld [vmem:[%s182 + $0x720] sm:$0xff]
      %v423 = vld [vmem:[%s182 + $0x728] sm:$0xff]
      %v424 = vld [vmem:[%s182 + $0x730] sm:$0xff]
      %v425 = vld [vmem:[%s182 + $0x738] sm:$0xff]
      %v426 = vld [vmem:[%s182 + $0x740] sm:$0xff]
      %v427 = vld [vmem:[%s182 + $0x748] sm:$0xff]
      %v428 = vld [vmem:[%s182 + $0x750] sm:$0xff]
      %v429 = vld [vmem:[%s182 + $0x758] sm:$0xff]
      %v430 = vld [vmem:[%s182 + $0x760] sm:$0xff]
      %v431 = vld [vmem:[%s182 + $0x768] sm:$0xff]
      %v432 = vld [vmem:[%s182 + $0x770] sm:$0xff]
      %v433 = vld [vmem:[%s182 + $0x778] sm:$0xff]
      %v434 = vld [vmem:[%s182 + $0x780] sm:$0xff]
      %v435 = vld [vmem:[%s182 + $0x788] sm:$0xff]
      %v436 = vld [vmem:[%s182 + $0x790] sm:$0xff]
      %v437 = vld [vmem:[%s182 + $0x798] sm:$0xff]
      %v438 = vld [vmem:[%s182 + $0x7a0] sm:$0xff]
      %v439 = vld [vmem:[%s182 + $0x7a8] sm:$0xff]
      %v440 = vld [vmem:[%s182 + $0x7b0] sm:$0xff]
      %v441 = vld [vmem:[%s182 + $0x7b8] sm:$0xff]
      %v442 = vld [vmem:[%s182 + $0x7c0] sm:$0xff]
      %v443 = vld [vmem:[%s182 + $0x7c8] sm:$0xff]
      %v444 = vld [vmem:[%s182 + $0x7d0] sm:$0xff]
      %v445 = vld [vmem:[%s182 + $0x7d8] sm:$0xff]
      %v446 = vld [vmem:[%s182 + $0x7e0] sm:$0xff]
      %v447 = vld [vmem:[%s182 + $0x7e8] sm:$0xff]
      %v448 = vld [vmem:[%s182 + $0x7f0] sm:$0xff]
      %v449 = vld [vmem:[%s182 + $0x7f8] sm:$0xff]
      %v450 = vpack.c.bf16 %v196, %v194
      %v451 = vpack.c.bf16 %v197, %v195
      %v452 = vpack.c.bf16 %v200, %v198
      %v453 = vpack.c.bf16 %v201, %v199
      %v454 = vpack.c.bf16 %v204, %v202
      %v455 = vpack.c.bf16 %v205, %v203
      %v456 = vpack.c.bf16 %v208, %v206
      %v457 = vpack.c.bf16 %v209, %v207
      %v458 = vpack.c.bf16 %v212, %v210
      %v459 = vpack.c.bf16 %v213, %v211
      %v460 = vpack.c.bf16 %v216, %v214
      %v461 = vpack.c.bf16 %v217, %v215
      %v462 = vpack.c.bf16 %v220, %v218
      %v463 = vpack.c.bf16 %v221, %v219
      %v464 = vpack.c.bf16 %v224, %v222
      %v465 = vpack.c.bf16 %v225, %v223
      %v466 = vpack.c.bf16 %v228, %v226
      %v467 = vpack.c.bf16 %v229, %v227
      %v468 = vpack.c.bf16 %v232, %v230
      %v469 = vpack.c.bf16 %v233, %v231
      %v470 = vpack.c.bf16 %v236, %v234
      %v471 = vpack.c.bf16 %v237, %v235
      %v472 = vpack.c.bf16 %v240, %v238
      %v473 = vpack.c.bf16 %v241, %v239
      %v474 = vpack.c.bf16 %v244, %v242
      %v475 = vpack.c.bf16 %v245, %v243
      %v476 = vpack.c.bf16 %v248, %v246
      %v477 = vpack.c.bf16 %v249, %v247
      %v478 = vpack.c.bf16 %v252, %v250
      %v479 = vpack.c.bf16 %v253, %v251
      %v480 = vpack.c.bf16 %v256, %v254
      %v481 = vpack.c.bf16 %v257, %v255
      %v482 = vpack.c.bf16 %v260, %v258
      %v483 = vpack.c.bf16 %v261, %v259
      %v484 = vpack.c.bf16 %v264, %v262
      %v485 = vpack.c.bf16 %v265, %v263
      %v486 = vpack.c.bf16 %v268, %v266
      %v487 = vpack.c.bf16 %v269, %v267
      %v488 = vpack.c.bf16 %v272, %v270
      %v489 = vpack.c.bf16 %v273, %v271
      %v490 = vpack.c.bf16 %v276, %v274
      %v491 = vpack.c.bf16 %v277, %v275
      %v492 = vpack.c.bf16 %v280, %v278
      %v493 = vpack.c.bf16 %v281, %v279
      %v494 = vpack.c.bf16 %v284, %v282
      %v495 = vpack.c.bf16 %v285, %v283
      %v496 = vpack.c.bf16 %v288, %v286
      %v497 = vpack.c.bf16 %v289, %v287
      %v498 = vpack.c.bf16 %v292, %v290
      %v499 = vpack.c.bf16 %v293, %v291
      %v500 = vpack.c.bf16 %v296, %v294
      %v501 = vpack.c.bf16 %v297, %v295
      %v502 = vpack.c.bf16 %v300, %v298
      %v503 = vpack.c.bf16 %v301, %v299
      %v504 = vpack.c.bf16 %v304, %v302
      %v505 = vpack.c.bf16 %v305, %v303
      %v506 = vpack.c.bf16 %v308, %v306
      %v507 = vpack.c.bf16 %v309, %v307
      %v508 = vpack.c.bf16 %v312, %v310
      %v509 = vpack.c.bf16 %v313, %v311
      %v510 = vpack.c.bf16 %v316, %v314
      %v511 = vpack.c.bf16 %v317, %v315
      %v512 = vpack.c.bf16 %v320, %v318
      %v513 = vpack.c.bf16 %v321, %v319
      %v514 = vpack.c.bf16 %v324, %v322
      %v515 = vpack.c.bf16 %v325, %v323
      %v516 = vpack.c.bf16 %v328, %v326
      %v517 = vpack.c.bf16 %v329, %v327
      %v518 = vpack.c.bf16 %v332, %v330
      %v519 = vpack.c.bf16 %v333, %v331
      %v520 = vpack.c.bf16 %v336, %v334
      %v521 = vpack.c.bf16 %v337, %v335
      %v522 = vpack.c.bf16 %v340, %v338
      %v523 = vpack.c.bf16 %v341, %v339
      %v524 = vpack.c.bf16 %v344, %v342
      %v525 = vpack.c.bf16 %v345, %v343
      %v526 = vpack.c.bf16 %v348, %v346
      %v527 = vpack.c.bf16 %v349, %v347
      %v528 = vpack.c.bf16 %v352, %v350
      %v529 = vpack.c.bf16 %v353, %v351
      %v530 = vpack.c.bf16 %v356, %v354
      %v531 = vpack.c.bf16 %v357, %v355
      %v532 = vpack.c.bf16 %v360, %v358
      %v533 = vpack.c.bf16 %v361, %v359
      %v534 = vpack.c.bf16 %v364, %v362
      %v535 = vpack.c.bf16 %v365, %v363
      %v536 = vpack.c.bf16 %v368, %v366
      %v537 = vpack.c.bf16 %v369, %v367
      %v538 = vpack.c.bf16 %v372, %v370
      %v539 = vpack.c.bf16 %v373, %v371
      %v540 = vpack.c.bf16 %v376, %v374
      %v541 = vpack.c.bf16 %v377, %v375
      %v542 = vpack.c.bf16 %v380, %v378
      %v543 = vpack.c.bf16 %v381, %v379
      %v544 = vpack.c.bf16 %v384, %v382
      %v545 = vpack.c.bf16 %v385, %v383
      %v546 = vpack.c.bf16 %v388, %v386
      %v547 = vpack.c.bf16 %v389, %v387
      %v548 = vpack.c.bf16 %v392, %v390
      %v549 = vpack.c.bf16 %v393, %v391
      %v550 = vpack.c.bf16 %v396, %v394
      %v551 = vpack.c.bf16 %v397, %v395
      %v552 = vpack.c.bf16 %v400, %v398
      %v553 = vpack.c.bf16 %v401, %v399
      %v554 = vpack.c.bf16 %v404, %v402
      %v555 = vpack.c.bf16 %v405, %v403
      %v556 = vpack.c.bf16 %v408, %v406
      %v557 = vpack.c.bf16 %v409, %v407
      %v558 = vpack.c.bf16 %v412, %v410
      %v559 = vpack.c.bf16 %v413, %v411
      %v560 = vpack.c.bf16 %v416, %v414
      %v561 = vpack.c.bf16 %v417, %v415
      %v562 = vpack.c.bf16 %v420, %v418
      %v563 = vpack.c.bf16 %v421, %v419
      %v564 = vpack.c.bf16 %v424, %v422
      %v565 = vpack.c.bf16 %v425, %v423
      %v566 = vpack.c.bf16 %v428, %v426
      %v567 = vpack.c.bf16 %v429, %v427
      %v568 = vpack.c.bf16 %v432, %v430
      %v569 = vpack.c.bf16 %v433, %v431
      %v570 = vpack.c.bf16 %v436, %v434
      %v571 = vpack.c.bf16 %v437, %v435
      %v572 = vpack.c.bf16 %v440, %v438
      %v573 = vpack.c.bf16 %v441, %v439
      %v574 = vpack.c.bf16 %v444, %v442
      %v575 = vpack.c.bf16 %v445, %v443
      %v576 = vpack.c.bf16 %v448, %v446
      %v577 = vpack.c.bf16 %v449, %v447
      %v578 = vld [vmem:[%s176] sm:$0xff]
      %v579 = vld [vmem:[%s176 + $0x8] sm:$0xff]
      %v580 = vld [vmem:[%s176 + $0x10] sm:$0xff]
      %v581 = vld [vmem:[%s176 + $0x18] sm:$0xff]
      %v582 = vld [vmem:[%s176 + $0x20] sm:$0xff]
      %v583 = vld [vmem:[%s176 + $0x28] sm:$0xff]
      %v584 = vld [vmem:[%s176 + $0x30] sm:$0xff]
      %v585 = vld [vmem:[%s176 + $0x38] sm:$0xff]
      %v586 = vld [vmem:[%s176 + $0x40] sm:$0xff]
      %v587 = vld [vmem:[%s176 + $0x48] sm:$0xff]
      %v588 = vld [vmem:[%s176 + $0x50] sm:$0xff]
      %v589 = vld [vmem:[%s176 + $0x58] sm:$0xff]
      %v590 = vld [vmem:[%s176 + $0x60] sm:$0xff]
      %v591 = vld [vmem:[%s176 + $0x68] sm:$0xff]
      %v592 = vld [vmem:[%s176 + $0x70] sm:$0xff]
      %v593 = vld [vmem:[%s176 + $0x78] sm:$0xff]
      %v594 = vld [vmem:[%s176 + $0x80] sm:$0xff]
      %v595 = vld [vmem:[%s176 + $0x88] sm:$0xff]
      %v596 = vld [vmem:[%s176 + $0x90] sm:$0xff]
      %v597 = vld [vmem:[%s176 + $0x98] sm:$0xff]
      %v598 = vld [vmem:[%s176 + $0xa0] sm:$0xff]
      %v599 = vld [vmem:[%s176 + $0xa8] sm:$0xff]
      %v600 = vld [vmem:[%s176 + $0xb0] sm:$0xff]
      %v601 = vld [vmem:[%s176 + $0xb8] sm:$0xff]
      %v602 = vld [vmem:[%s176 + $0xc0] sm:$0xff]
      %v603 = vld [vmem:[%s176 + $0xc8] sm:$0xff]
      %v604 = vld [vmem:[%s176 + $0xd0] sm:$0xff]
      %v605 = vld [vmem:[%s176 + $0xd8] sm:$0xff]
      %v606 = vld [vmem:[%s176 + $0xe0] sm:$0xff]
      %v607 = vld [vmem:[%s176 + $0xe8] sm:$0xff]
      %v608 = vld [vmem:[%s176 + $0xf0] sm:$0xff]
      %v609 = vld [vmem:[%s176 + $0xf8] sm:$0xff]
      %v610 = vld [vmem:[%s176 + $0x100] sm:$0xff]
      %v611 = vld [vmem:[%s176 + $0x108] sm:$0xff]
      %v612 = vld [vmem:[%s176 + $0x110] sm:$0xff]
      %v613 = vld [vmem:[%s176 + $0x118] sm:$0xff]
      %v614 = vld [vmem:[%s176 + $0x120] sm:$0xff]
      %v615 = vld [vmem:[%s176 + $0x128] sm:$0xff]
      %v616 = vld [vmem:[%s176 + $0x130] sm:$0xff]
      %v617 = vld [vmem:[%s176 + $0x138] sm:$0xff]
      %v618 = vld [vmem:[%s176 + $0x140] sm:$0xff]
      %v619 = vld [vmem:[%s176 + $0x148] sm:$0xff]
      %v620 = vld [vmem:[%s176 + $0x150] sm:$0xff]
      %v621 = vld [vmem:[%s176 + $0x158] sm:$0xff]
      %v622 = vld [vmem:[%s176 + $0x160] sm:$0xff]
      %v623 = vld [vmem:[%s176 + $0x168] sm:$0xff]
      %v624 = vld [vmem:[%s176 + $0x170] sm:$0xff]
      %v625 = vld [vmem:[%s176 + $0x178] sm:$0xff]
      %v626 = vld [vmem:[%s176 + $0x180] sm:$0xff]
      %v627 = vld [vmem:[%s176 + $0x188] sm:$0xff]
      %v628 = vld [vmem:[%s176 + $0x190] sm:$0xff]
      %v629 = vld [vmem:[%s176 + $0x198] sm:$0xff]
      %v630 = vld [vmem:[%s176 + $0x1a0] sm:$0xff]
      %v631 = vld [vmem:[%s176 + $0x1a8] sm:$0xff]
      %v632 = vld [vmem:[%s176 + $0x1b0] sm:$0xff]
      %v633 = vld [vmem:[%s176 + $0x1b8] sm:$0xff]
      %v634 = vld [vmem:[%s176 + $0x1c0] sm:$0xff]
      %v635 = vld [vmem:[%s176 + $0x1c8] sm:$0xff]
      %v636 = vld [vmem:[%s176 + $0x1d0] sm:$0xff]
      %v637 = vld [vmem:[%s176 + $0x1d8] sm:$0xff]
      %v638 = vld [vmem:[%s176 + $0x1e0] sm:$0xff]
      %v639 = vld [vmem:[%s176 + $0x1e8] sm:$0xff]
      %v640 = vld [vmem:[%s176 + $0x1f0] sm:$0xff]
      %v641 = vld [vmem:[%s176 + $0x1f8] sm:$0xff]
      %v642 = vld [vmem:[%s176 + $0x200] sm:$0xff]
      %v643 = vld [vmem:[%s176 + $0x208] sm:$0xff]
      %v644 = vld [vmem:[%s176 + $0x210] sm:$0xff]
      %v645 = vld [vmem:[%s176 + $0x218] sm:$0xff]
      %v646 = vld [vmem:[%s176 + $0x220] sm:$0xff]
      %v647 = vld [vmem:[%s176 + $0x228] sm:$0xff]
      %v648 = vld [vmem:[%s176 + $0x230] sm:$0xff]
      %v649 = vld [vmem:[%s176 + $0x238] sm:$0xff]
      %v650 = vld [vmem:[%s176 + $0x240] sm:$0xff]
      %v651 = vld [vmem:[%s176 + $0x248] sm:$0xff]
      %v652 = vld [vmem:[%s176 + $0x250] sm:$0xff]
      %v653 = vld [vmem:[%s176 + $0x258] sm:$0xff]
      %v654 = vld [vmem:[%s176 + $0x260] sm:$0xff]
      %v655 = vld [vmem:[%s176 + $0x268] sm:$0xff]
      %v656 = vld [vmem:[%s176 + $0x270] sm:$0xff]
      %v657 = vld [vmem:[%s176 + $0x278] sm:$0xff]
      %v658 = vld [vmem:[%s176 + $0x280] sm:$0xff]
      %v659 = vld [vmem:[%s176 + $0x288] sm:$0xff]
      %v660 = vld [vmem:[%s176 + $0x290] sm:$0xff]
      %v661 = vld [vmem:[%s176 + $0x298] sm:$0xff]
      %v662 = vld [vmem:[%s176 + $0x2a0] sm:$0xff]
      %v663 = vld [vmem:[%s176 + $0x2a8] sm:$0xff]
      %v664 = vld [vmem:[%s176 + $0x2b0] sm:$0xff]
      %v665 = vld [vmem:[%s176 + $0x2b8] sm:$0xff]
      %v666 = vld [vmem:[%s176 + $0x2c0] sm:$0xff]
      %v667 = vld [vmem:[%s176 + $0x2c8] sm:$0xff]
      %v668 = vld [vmem:[%s176 + $0x2d0] sm:$0xff]
      %v669 = vld [vmem:[%s176 + $0x2d8] sm:$0xff]
      %v670 = vld [vmem:[%s176 + $0x2e0] sm:$0xff]
      %v671 = vld [vmem:[%s176 + $0x2e8] sm:$0xff]
      %v672 = vld [vmem:[%s176 + $0x2f0] sm:$0xff]
      %v673 = vld [vmem:[%s176 + $0x2f8] sm:$0xff]
      %v674 = vld [vmem:[%s176 + $0x300] sm:$0xff]
      %v675 = vld [vmem:[%s176 + $0x308] sm:$0xff]
      %v676 = vld [vmem:[%s176 + $0x310] sm:$0xff]
      %v677 = vld [vmem:[%s176 + $0x318] sm:$0xff]
      %v678 = vld [vmem:[%s176 + $0x320] sm:$0xff]
      %v679 = vld [vmem:[%s176 + $0x328] sm:$0xff]
      %v680 = vld [vmem:[%s176 + $0x330] sm:$0xff]
      %v681 = vld [vmem:[%s176 + $0x338] sm:$0xff]
      %v682 = vld [vmem:[%s176 + $0x340] sm:$0xff]
      %v683 = vld [vmem:[%s176 + $0x348] sm:$0xff]
      %v684 = vld [vmem:[%s176 + $0x350] sm:$0xff]
      %v685 = vld [vmem:[%s176 + $0x358] sm:$0xff]
      %v686 = vld [vmem:[%s176 + $0x360] sm:$0xff]
      %v687 = vld [vmem:[%s176 + $0x368] sm:$0xff]
      %v688 = vld [vmem:[%s176 + $0x370] sm:$0xff]
      %v689 = vld [vmem:[%s176 + $0x378] sm:$0xff]
      %v690 = vld [vmem:[%s176 + $0x380] sm:$0xff]
      %v691 = vld [vmem:[%s176 + $0x388] sm:$0xff]
      %v692 = vld [vmem:[%s176 + $0x390] sm:$0xff]
      %v693 = vld [vmem:[%s176 + $0x398] sm:$0xff]
      %v694 = vld [vmem:[%s176 + $0x3a0] sm:$0xff]
      %v695 = vld [vmem:[%s176 + $0x3a8] sm:$0xff]
      %v696 = vld [vmem:[%s176 + $0x3b0] sm:$0xff]
      %v697 = vld [vmem:[%s176 + $0x3b8] sm:$0xff]
      %v698 = vld [vmem:[%s176 + $0x3c0] sm:$0xff]
      %v699 = vld [vmem:[%s176 + $0x3c8] sm:$0xff]
      %v700 = vld [vmem:[%s176 + $0x3d0] sm:$0xff]
      %v701 = vld [vmem:[%s176 + $0x3d8] sm:$0xff]
      %v702 = vld [vmem:[%s176 + $0x3e0] sm:$0xff]
      %v703 = vld [vmem:[%s176 + $0x3e8] sm:$0xff]
      %v704 = vld [vmem:[%s176 + $0x3f0] sm:$0xff]
      %v705 = vld [vmem:[%s176 + $0x3f8] sm:$0xff]
      %v834 = vunpack.c.l.b16 %v578
      %v835 = vunpack.c.h.b16 %v578
      %v836 = vunpack.c.l.b16 %v579
      %v837 = vunpack.c.h.b16 %v579
      %v838 = vunpack.c.l.b16 %v580
      %v839 = vunpack.c.h.b16 %v580
      %v840 = vunpack.c.l.b16 %v581
      %v841 = vunpack.c.h.b16 %v581
      %v842 = vunpack.c.l.b16 %v582
      %v843 = vunpack.c.h.b16 %v582
      %v844 = vunpack.c.l.b16 %v583
      %v845 = vunpack.c.h.b16 %v583
      %v846 = vunpack.c.l.b16 %v584
      %v847 = vunpack.c.h.b16 %v584
      %v848 = vunpack.c.l.b16 %v585
      %v849 = vunpack.c.h.b16 %v585
      %v850 = vunpack.c.l.b16 %v586
      %v851 = vunpack.c.h.b16 %v586
      %v852 = vunpack.c.l.b16 %v587
      %v853 = vunpack.c.h.b16 %v587
      %v854 = vunpack.c.l.b16 %v588
      %v855 = vunpack.c.h.b16 %v588
      %v856 = vunpack.c.l.b16 %v589
      %v857 = vunpack.c.h.b16 %v589
      %v858 = vunpack.c.l.b16 %v590
      %v859 = vunpack.c.h.b16 %v590
      %v860 = vunpack.c.l.b16 %v591
      %v861 = vunpack.c.h.b16 %v591
      %v862 = vunpack.c.l.b16 %v592
      %v863 = vunpack.c.h.b16 %v592
      %v864 = vunpack.c.l.b16 %v593
      %v865 = vunpack.c.h.b16 %v593
      %v866 = vunpack.c.l.b16 %v594
      %v867 = vunpack.c.h.b16 %v594
      %v868 = vunpack.c.l.b16 %v595
      %v869 = vunpack.c.h.b16 %v595
      %v870 = vunpack.c.l.b16 %v596
      %v871 = vunpack.c.h.b16 %v596
      %v872 = vunpack.c.l.b16 %v597
      %v873 = vunpack.c.h.b16 %v597
      %v874 = vunpack.c.l.b16 %v598
      %v875 = vunpack.c.h.b16 %v598
      %v876 = vunpack.c.l.b16 %v599
      %v877 = vunpack.c.h.b16 %v599
      %v878 = vunpack.c.l.b16 %v600
      %v879 = vunpack.c.h.b16 %v600
      %v880 = vunpack.c.l.b16 %v601
      %v881 = vunpack.c.h.b16 %v601
      %v882 = vunpack.c.l.b16 %v602
      %v883 = vunpack.c.h.b16 %v602
      %v884 = vunpack.c.l.b16 %v603
      %v885 = vunpack.c.h.b16 %v603
      %v886 = vunpack.c.l.b16 %v604
      %v887 = vunpack.c.h.b16 %v604
      %v888 = vunpack.c.l.b16 %v605
      %v889 = vunpack.c.h.b16 %v605
      %v890 = vunpack.c.l.b16 %v606
      %v891 = vunpack.c.h.b16 %v606
      %v892 = vunpack.c.l.b16 %v607
      %v893 = vunpack.c.h.b16 %v607
      %v894 = vunpack.c.l.b16 %v608
      %v895 = vunpack.c.h.b16 %v608
      %v896 = vunpack.c.l.b16 %v609
      %v897 = vunpack.c.h.b16 %v609
      %v898 = vunpack.c.l.b16 %v610
      %v899 = vunpack.c.h.b16 %v610
      %v900 = vunpack.c.l.b16 %v611
      %v901 = vunpack.c.h.b16 %v611
      %v902 = vunpack.c.l.b16 %v612
      %v903 = vunpack.c.h.b16 %v612
      %v904 = vunpack.c.l.b16 %v613
      %v905 = vunpack.c.h.b16 %v613
      %v906 = vunpack.c.l.b16 %v614
      %v907 = vunpack.c.h.b16 %v614
      %v908 = vunpack.c.l.b16 %v615
      %v909 = vunpack.c.h.b16 %v615
      %v910 = vunpack.c.l.b16 %v616
      %v911 = vunpack.c.h.b16 %v616
      %v912 = vunpack.c.l.b16 %v617
      %v913 = vunpack.c.h.b16 %v617
      %v914 = vunpack.c.l.b16 %v618
      %v915 = vunpack.c.h.b16 %v618
      %v916 = vunpack.c.l.b16 %v619
      %v917 = vunpack.c.h.b16 %v619
      %v918 = vunpack.c.l.b16 %v620
      %v919 = vunpack.c.h.b16 %v620
      %v920 = vunpack.c.l.b16 %v621
      %v921 = vunpack.c.h.b16 %v621
      %v922 = vunpack.c.l.b16 %v622
      %v923 = vunpack.c.h.b16 %v622
      %v924 = vunpack.c.l.b16 %v623
      %v925 = vunpack.c.h.b16 %v623
      %v926 = vunpack.c.l.b16 %v624
      %v927 = vunpack.c.h.b16 %v624
      %v928 = vunpack.c.l.b16 %v625
      %v929 = vunpack.c.h.b16 %v625
      %v930 = vunpack.c.l.b16 %v626
      %v931 = vunpack.c.h.b16 %v626
      %v932 = vunpack.c.l.b16 %v627
      %v933 = vunpack.c.h.b16 %v627
      %v934 = vunpack.c.l.b16 %v628
      %v935 = vunpack.c.h.b16 %v628
      %v936 = vunpack.c.l.b16 %v629
      %v937 = vunpack.c.h.b16 %v629
      %v938 = vunpack.c.l.b16 %v630
      %v939 = vunpack.c.h.b16 %v630
      %v940 = vunpack.c.l.b16 %v631
      %v941 = vunpack.c.h.b16 %v631
      %v942 = vunpack.c.l.b16 %v632
      %v943 = vunpack.c.h.b16 %v632
      %v944 = vunpack.c.l.b16 %v633
      %v945 = vunpack.c.h.b16 %v633
      %v946 = vunpack.c.l.b16 %v634
      %v947 = vunpack.c.h.b16 %v634
      %v948 = vunpack.c.l.b16 %v635
      %v949 = vunpack.c.h.b16 %v635
      %v950 = vunpack.c.l.b16 %v636
      %v951 = vunpack.c.h.b16 %v636
      %v952 = vunpack.c.l.b16 %v637
      %v953 = vunpack.c.h.b16 %v637
      %v954 = vunpack.c.l.b16 %v638
      %v955 = vunpack.c.h.b16 %v638
      %v956 = vunpack.c.l.b16 %v639
      %v957 = vunpack.c.h.b16 %v639
      %v958 = vunpack.c.l.b16 %v640
      %v959 = vunpack.c.h.b16 %v640
      %v960 = vunpack.c.l.b16 %v641
      %v961 = vunpack.c.h.b16 %v641
      %v962 = vunpack.c.l.b16 %v642
      %v963 = vunpack.c.h.b16 %v642
      %v964 = vunpack.c.l.b16 %v643
      %v965 = vunpack.c.h.b16 %v643
      %v966 = vunpack.c.l.b16 %v644
      %v967 = vunpack.c.h.b16 %v644
      %v968 = vunpack.c.l.b16 %v645
      %v969 = vunpack.c.h.b16 %v645
      %v970 = vunpack.c.l.b16 %v646
      %v971 = vunpack.c.h.b16 %v646
      %v972 = vunpack.c.l.b16 %v647
      %v973 = vunpack.c.h.b16 %v647
      %v974 = vunpack.c.l.b16 %v648
      %v975 = vunpack.c.h.b16 %v648
      %v976 = vunpack.c.l.b16 %v649
      %v977 = vunpack.c.h.b16 %v649
      %v978 = vunpack.c.l.b16 %v650
      %v979 = vunpack.c.h.b16 %v650
      %v980 = vunpack.c.l.b16 %v651
      %v981 = vunpack.c.h.b16 %v651
      %v982 = vunpack.c.l.b16 %v652
      %v983 = vunpack.c.h.b16 %v652
      %v984 = vunpack.c.l.b16 %v653
      %v985 = vunpack.c.h.b16 %v653
      %v986 = vunpack.c.l.b16 %v654
      %v987 = vunpack.c.h.b16 %v654
      %v988 = vunpack.c.l.b16 %v655
      %v989 = vunpack.c.h.b16 %v655
      %v990 = vunpack.c.l.b16 %v656
      %v991 = vunpack.c.h.b16 %v656
      %v992 = vunpack.c.l.b16 %v657
      %v993 = vunpack.c.h.b16 %v657
      %v994 = vunpack.c.l.b16 %v658
      %v995 = vunpack.c.h.b16 %v658
      %v996 = vunpack.c.l.b16 %v659
      %v997 = vunpack.c.h.b16 %v659
      %v998 = vunpack.c.l.b16 %v660
      %v999 = vunpack.c.h.b16 %v660
      %v1000 = vunpack.c.l.b16 %v661
      %v1001 = vunpack.c.h.b16 %v661
      %v1002 = vunpack.c.l.b16 %v662
      %v1003 = vunpack.c.h.b16 %v662
      %v1004 = vunpack.c.l.b16 %v663
      %v1005 = vunpack.c.h.b16 %v663
      %v1006 = vunpack.c.l.b16 %v664
      %v1007 = vunpack.c.h.b16 %v664
      %v1008 = vunpack.c.l.b16 %v665
      %v1009 = vunpack.c.h.b16 %v665
      %v1010 = vunpack.c.l.b16 %v666
      %v1011 = vunpack.c.h.b16 %v666
      %v1012 = vunpack.c.l.b16 %v667
      %v1013 = vunpack.c.h.b16 %v667
      %v1014 = vunpack.c.l.b16 %v668
      %v1015 = vunpack.c.h.b16 %v668
      %v1016 = vunpack.c.l.b16 %v669
      %v1017 = vunpack.c.h.b16 %v669
      %v1018 = vunpack.c.l.b16 %v670
      %v1019 = vunpack.c.h.b16 %v670
      %v1020 = vunpack.c.l.b16 %v671
      %v1021 = vunpack.c.h.b16 %v671
      %v1022 = vunpack.c.l.b16 %v672
      %v1023 = vunpack.c.h.b16 %v672
      %v1024 = vunpack.c.l.b16 %v673
      %v1025 = vunpack.c.h.b16 %v673
      %v1026 = vunpack.c.l.b16 %v674
      %v1027 = vunpack.c.h.b16 %v674
      %v1028 = vunpack.c.l.b16 %v675
      %v1029 = vunpack.c.h.b16 %v675
      %v1030 = vunpack.c.l.b16 %v676
      %v1031 = vunpack.c.h.b16 %v676
      %v1032 = vunpack.c.l.b16 %v677
      %v1033 = vunpack.c.h.b16 %v677
      %v1034 = vunpack.c.l.b16 %v678
      %v1035 = vunpack.c.h.b16 %v678
      %v1036 = vunpack.c.l.b16 %v679
      %v1037 = vunpack.c.h.b16 %v679
      %v1038 = vunpack.c.l.b16 %v680
      %v1039 = vunpack.c.h.b16 %v680
      %v1040 = vunpack.c.l.b16 %v681
      %v1041 = vunpack.c.h.b16 %v681
      %v1042 = vunpack.c.l.b16 %v682
      %v1043 = vunpack.c.h.b16 %v682
      %v1044 = vunpack.c.l.b16 %v683
      %v1045 = vunpack.c.h.b16 %v683
      %v1046 = vunpack.c.l.b16 %v684
      %v1047 = vunpack.c.h.b16 %v684
      %v1048 = vunpack.c.l.b16 %v685
      %v1049 = vunpack.c.h.b16 %v685
      %v1050 = vunpack.c.l.b16 %v686
      %v1051 = vunpack.c.h.b16 %v686
      %v1052 = vunpack.c.l.b16 %v687
      %v1053 = vunpack.c.h.b16 %v687
      %v1054 = vunpack.c.l.b16 %v688
      %v1055 = vunpack.c.h.b16 %v688
      %v1056 = vunpack.c.l.b16 %v689
      %v1057 = vunpack.c.h.b16 %v689
      %v1058 = vunpack.c.l.b16 %v690
      %v1059 = vunpack.c.h.b16 %v690
      %v1060 = vunpack.c.l.b16 %v691
      %v1061 = vunpack.c.h.b16 %v691
      %v1062 = vunpack.c.l.b16 %v692
      %v1063 = vunpack.c.h.b16 %v692
      %v1064 = vunpack.c.l.b16 %v693
      %v1065 = vunpack.c.h.b16 %v693
      %v1066 = vunpack.c.l.b16 %v694
      %v1067 = vunpack.c.h.b16 %v694
      %v1068 = vunpack.c.l.b16 %v695
      %v1069 = vunpack.c.h.b16 %v695
      %v1070 = vunpack.c.l.b16 %v696
      %v1071 = vunpack.c.h.b16 %v696
      %v1072 = vunpack.c.l.b16 %v697
      %v1073 = vunpack.c.h.b16 %v697
      %v1074 = vunpack.c.l.b16 %v698
      %v1075 = vunpack.c.h.b16 %v698
      %v1076 = vunpack.c.l.b16 %v699
      %v1077 = vunpack.c.h.b16 %v699
      %v1078 = vunpack.c.l.b16 %v700
      %v1079 = vunpack.c.h.b16 %v700
      %v1080 = vunpack.c.l.b16 %v701
      %v1081 = vunpack.c.h.b16 %v701
      %v1082 = vunpack.c.l.b16 %v702
      %v1083 = vunpack.c.h.b16 %v702
      %v1084 = vunpack.c.l.b16 %v703
      %v1085 = vunpack.c.h.b16 %v703
      %v1086 = vunpack.c.l.b16 %v704
      %v1087 = vunpack.c.h.b16 %v704
      %v1088 = vunpack.c.l.b16 %v705
      %v1089 = vunpack.c.h.b16 %v705
      %v1090 = vpack.c.b16 %v842, %v834
      %v1091 = vpack.c.b16 %v843, %v835
      %v1092 = vpack.c.b16 %v844, %v836
      %v1093 = vpack.c.b16 %v845, %v837
      %v1094 = vpack.c.b16 %v846, %v838
      %v1095 = vpack.c.b16 %v847, %v839
      %v1096 = vpack.c.b16 %v848, %v840
      %v1097 = vpack.c.b16 %v849, %v841
      %v1098 = vpack.c.b16 %v858, %v850
      %v1099 = vpack.c.b16 %v859, %v851
      %v1100 = vpack.c.b16 %v860, %v852
      %v1101 = vpack.c.b16 %v861, %v853
      %v1102 = vpack.c.b16 %v862, %v854
      %v1103 = vpack.c.b16 %v863, %v855
      %v1104 = vpack.c.b16 %v864, %v856
      %v1105 = vpack.c.b16 %v865, %v857
      %v1106 = vpack.c.b16 %v874, %v866
      %v1107 = vpack.c.b16 %v875, %v867
      %v1108 = vpack.c.b16 %v876, %v868
      %v1109 = vpack.c.b16 %v877, %v869
      %v1110 = vpack.c.b16 %v878, %v870
      %v1111 = vpack.c.b16 %v879, %v871
      %v1112 = vpack.c.b16 %v880, %v872
      %v1113 = vpack.c.b16 %v881, %v873
      %v1114 = vpack.c.b16 %v890, %v882
      %v1115 = vpack.c.b16 %v891, %v883
      %v1116 = vpack.c.b16 %v892, %v884
      %v1117 = vpack.c.b16 %v893, %v885
      %v1118 = vpack.c.b16 %v894, %v886
      %v1119 = vpack.c.b16 %v895, %v887
      %v1120 = vpack.c.b16 %v896, %v888
      %v1121 = vpack.c.b16 %v897, %v889
      %v1122 = vpack.c.b16 %v906, %v898
      %v1123 = vpack.c.b16 %v907, %v899
      %v1124 = vpack.c.b16 %v908, %v900
      %v1125 = vpack.c.b16 %v909, %v901
      %v1126 = vpack.c.b16 %v910, %v902
      %v1127 = vpack.c.b16 %v911, %v903
      %v1128 = vpack.c.b16 %v912, %v904
      %v1129 = vpack.c.b16 %v913, %v905
      %v1130 = vpack.c.b16 %v922, %v914
      %v1131 = vpack.c.b16 %v923, %v915
      %v1132 = vpack.c.b16 %v924, %v916
      %v1133 = vpack.c.b16 %v925, %v917
      %v1134 = vpack.c.b16 %v926, %v918
      %v1135 = vpack.c.b16 %v927, %v919
      %v1136 = vpack.c.b16 %v928, %v920
      %v1137 = vpack.c.b16 %v929, %v921
      %v1138 = vpack.c.b16 %v938, %v930
      %v1139 = vpack.c.b16 %v939, %v931
      %v1140 = vpack.c.b16 %v940, %v932
      %v1141 = vpack.c.b16 %v941, %v933
      %v1142 = vpack.c.b16 %v942, %v934
      %v1143 = vpack.c.b16 %v943, %v935
      %v1144 = vpack.c.b16 %v944, %v936
      %v1145 = vpack.c.b16 %v945, %v937
      %v1146 = vpack.c.b16 %v954, %v946
      %v1147 = vpack.c.b16 %v955, %v947
      %v1148 = vpack.c.b16 %v956, %v948
      %v1149 = vpack.c.b16 %v957, %v949
      %v1150 = vpack.c.b16 %v958, %v950
      %v1151 = vpack.c.b16 %v959, %v951
      %v1152 = vpack.c.b16 %v960, %v952
      %v1153 = vpack.c.b16 %v961, %v953
      %v1154 = vpack.c.b16 %v970, %v962
      %v1155 = vpack.c.b16 %v971, %v963
      %v1156 = vpack.c.b16 %v972, %v964
      %v1157 = vpack.c.b16 %v973, %v965
      %v1158 = vpack.c.b16 %v974, %v966
      %v1159 = vpack.c.b16 %v975, %v967
      %v1160 = vpack.c.b16 %v976, %v968
      %v1161 = vpack.c.b16 %v977, %v969
      %v1162 = vpack.c.b16 %v986, %v978
      %v1163 = vpack.c.b16 %v987, %v979
      %v1164 = vpack.c.b16 %v988, %v980
      %v1165 = vpack.c.b16 %v989, %v981
      %v1166 = vpack.c.b16 %v990, %v982
      %v1167 = vpack.c.b16 %v991, %v983
      %v1168 = vpack.c.b16 %v992, %v984
      %v1169 = vpack.c.b16 %v993, %v985
      %v1170 = vpack.c.b16 %v1002, %v994
      %v1171 = vpack.c.b16 %v1003, %v995
      %v1172 = vpack.c.b16 %v1004, %v996
      %v1173 = vpack.c.b16 %v1005, %v997
      %v1174 = vpack.c.b16 %v1006, %v998
      %v1175 = vpack.c.b16 %v1007, %v999
      %v1176 = vpack.c.b16 %v1008, %v1000
      %v1177 = vpack.c.b16 %v1009, %v1001
      %v1178 = vpack.c.b16 %v1018, %v1010
      %v1179 = vpack.c.b16 %v1019, %v1011
      %v1180 = vpack.c.b16 %v1020, %v1012
      %v1181 = vpack.c.b16 %v1021, %v1013
      %v1182 = vpack.c.b16 %v1022, %v1014
      %v1183 = vpack.c.b16 %v1023, %v1015
      %v1184 = vpack.c.b16 %v1024, %v1016
      %v1185 = vpack.c.b16 %v1025, %v1017
      %v1186 = vpack.c.b16 %v1034, %v1026
      %v1187 = vpack.c.b16 %v1035, %v1027
      %v1188 = vpack.c.b16 %v1036, %v1028
      %v1189 = vpack.c.b16 %v1037, %v1029
      %v1190 = vpack.c.b16 %v1038, %v1030
      %v1191 = vpack.c.b16 %v1039, %v1031
      %v1192 = vpack.c.b16 %v1040, %v1032
      %v1193 = vpack.c.b16 %v1041, %v1033
      %v1194 = vpack.c.b16 %v1050, %v1042
      %v1195 = vpack.c.b16 %v1051, %v1043
      %v1196 = vpack.c.b16 %v1052, %v1044
      %v1197 = vpack.c.b16 %v1053, %v1045
      %v1198 = vpack.c.b16 %v1054, %v1046
      %v1199 = vpack.c.b16 %v1055, %v1047
      %v1200 = vpack.c.b16 %v1056, %v1048
      %v1201 = vpack.c.b16 %v1057, %v1049
      %v1202 = vpack.c.b16 %v1066, %v1058
      %v1203 = vpack.c.b16 %v1067, %v1059
      %v1204 = vpack.c.b16 %v1068, %v1060
      %v1205 = vpack.c.b16 %v1069, %v1061
      %v1206 = vpack.c.b16 %v1070, %v1062
      %v1207 = vpack.c.b16 %v1071, %v1063
      %v1208 = vpack.c.b16 %v1072, %v1064
      %v1209 = vpack.c.b16 %v1073, %v1065
      %v1210 = vpack.c.b16 %v1082, %v1074
      %v1211 = vpack.c.b16 %v1083, %v1075
      %v1212 = vpack.c.b16 %v1084, %v1076
      %v1213 = vpack.c.b16 %v1085, %v1077
      %v1214 = vpack.c.b16 %v1086, %v1078
      %v1215 = vpack.c.b16 %v1087, %v1079
      %v1216 = vpack.c.b16 %v1088, %v1080
      %v1217 = vpack.c.b16 %v1089, %v1081
      %1346 = vmatpush.bf16.msra.mxu0 %v464
      %1347 = vmatpush.bf16.msra.mxu0 %v462
      %1348 = vmatpush.bf16.msra.mxu0 %v460
      %1349 = vmatpush.bf16.msra.mxu0 %v458
      %1350 = vmatpush.bf16.msra.mxu0 %v456
      %1351 = vmatpush.bf16.msra.mxu0 %v454
      %1352 = vmatpush.bf16.msra.mxu0 %v452
      %1353 = vmatpush.bf16.msra.mxu0 %v450
      %1354 = vmatmul.bf16.gmra.mxu0 %v1090
      %v1355 = vpop.f32.mrf.mxu0
      %v1356 = vadd.f32 0.0, %v1355
      %v1357 = vpop.f32.mrf.mxu0
      %v1358 = vadd.f32 0.0, %v1357
      %1359 = vmatmul.bf16.gmra.mxu0 %v1098
      %v1360 = vpop.f32.mrf.mxu0
      %v1361 = vadd.f32 0.0, %v1360
      %v1362 = vpop.f32.mrf.mxu0
      %v1363 = vadd.f32 0.0, %v1362
      %1364 = vmatmul.bf16.gmra.mxu0 %v1106
      %v1365 = vpop.f32.mrf.mxu0
      %v1366 = vadd.f32 0.0, %v1365
      %v1367 = vpop.f32.mrf.mxu0
      %v1368 = vadd.f32 0.0, %v1367
      %1369 = vmatmul.bf16.gmra.mxu0 %v1114
      %v1370 = vpop.f32.mrf.mxu0
      %v1371 = vadd.f32 0.0, %v1370
      %v1372 = vpop.f32.mrf.mxu0
      %v1373 = vadd.f32 0.0, %v1372
      %1374 = vmatmul.bf16.gmra.mxu0 %v1122
      %v1375 = vpop.f32.mrf.mxu0
      %v1376 = vadd.f32 0.0, %v1375
      %v1377 = vpop.f32.mrf.mxu0
      %v1378 = vadd.f32 0.0, %v1377
      %1379 = vmatmul.bf16.gmra.mxu0 %v1130
      %v1380 = vpop.f32.mrf.mxu0
      %v1381 = vadd.f32 0.0, %v1380
      %v1382 = vpop.f32.mrf.mxu0
      %v1383 = vadd.f32 0.0, %v1382
      %1384 = vmatmul.bf16.gmra.mxu0 %v1138
      %v1385 = vpop.f32.mrf.mxu0
      %v1386 = vadd.f32 0.0, %v1385
      %v1387 = vpop.f32.mrf.mxu0
      %v1388 = vadd.f32 0.0, %v1387
      %1389 = vmatmul.bf16.gmra.mxu0 %v1146
      %v1390 = vpop.f32.mrf.mxu0
      %v1391 = vadd.f32 0.0, %v1390
      %v1392 = vpop.f32.mrf.mxu0
      %v1393 = vadd.f32 0.0, %v1392
      %1394 = vmatmul.bf16.gmra.mxu0 %v1154
      %v1395 = vpop.f32.mrf.mxu0
      %v1396 = vadd.f32 0.0, %v1395
      %v1397 = vpop.f32.mrf.mxu0
      %v1398 = vadd.f32 0.0, %v1397
      %1399 = vmatmul.bf16.gmra.mxu0 %v1162
      %v1400 = vpop.f32.mrf.mxu0
      %v1401 = vadd.f32 0.0, %v1400
      %v1402 = vpop.f32.mrf.mxu0
      %v1403 = vadd.f32 0.0, %v1402
      %1404 = vmatmul.bf16.gmra.mxu0 %v1170
      %v1405 = vpop.f32.mrf.mxu0
      %v1406 = vadd.f32 0.0, %v1405
      %v1407 = vpop.f32.mrf.mxu0
      %v1408 = vadd.f32 0.0, %v1407
      %1409 = vmatmul.bf16.gmra.mxu0 %v1178
      %v1410 = vpop.f32.mrf.mxu0
      %v1411 = vadd.f32 0.0, %v1410
      %v1412 = vpop.f32.mrf.mxu0
      %v1413 = vadd.f32 0.0, %v1412
      %1414 = vmatmul.bf16.gmra.mxu0 %v1186
      %v1415 = vpop.f32.mrf.mxu0
      %v1416 = vadd.f32 0.0, %v1415
      %v1417 = vpop.f32.mrf.mxu0
      %v1418 = vadd.f32 0.0, %v1417
      %1419 = vmatmul.bf16.gmra.mxu0 %v1194
      %v1420 = vpop.f32.mrf.mxu0
      %v1421 = vadd.f32 0.0, %v1420
      %v1422 = vpop.f32.mrf.mxu0
      %v1423 = vadd.f32 0.0, %v1422
      %1424 = vmatmul.bf16.gmra.mxu0 %v1202
      %v1425 = vpop.f32.mrf.mxu0
      %v1426 = vadd.f32 0.0, %v1425
      %v1427 = vpop.f32.mrf.mxu0
      %v1428 = vadd.f32 0.0, %v1427
      %1429 = vmatmul.bf16.gmra.mxu0 %v1210
      %v1430 = vpop.f32.mrf.mxu0
      %v1431 = vadd.f32 0.0, %v1430
      %v1432 = vpop.f32.mrf.mxu0
      %v1433 = vadd.f32 0.0, %v1432
      %1434 = vdwg.mxu0
      %1435 = vmatpush.bf16.msra.mxu0 %v480
      %1436 = vmatpush.bf16.msra.mxu0 %v478
      %1437 = vmatpush.bf16.msra.mxu0 %v476
      %1438 = vmatpush.bf16.msra.mxu0 %v474
      %1439 = vmatpush.bf16.msra.mxu0 %v472
      %1440 = vmatpush.bf16.msra.mxu0 %v470
      %1441 = vmatpush.bf16.msra.mxu0 %v468
      %1442 = vmatpush.bf16.msra.mxu0 %v466
      %1443 = vmatmul.bf16.gmra.mxu0 %v1091
      %v1444 = vpop.f32.mrf.mxu0
      %v1445 = vadd.f32 %v1356, %v1444
      %v1446 = vpop.f32.mrf.mxu0
      %v1447 = vadd.f32 %v1358, %v1446
      %1448 = vmatmul.bf16.gmra.mxu0 %v1099
      %v1449 = vpop.f32.mrf.mxu0
      %v1450 = vadd.f32 %v1361, %v1449
      %v1451 = vpop.f32.mrf.mxu0
      %v1452 = vadd.f32 %v1363, %v1451
      %1453 = vmatmul.bf16.gmra.mxu0 %v1107
      %v1454 = vpop.f32.mrf.mxu0
      %v1455 = vadd.f32 %v1366, %v1454
      %v1456 = vpop.f32.mrf.mxu0
      %v1457 = vadd.f32 %v1368, %v1456
      %1458 = vmatmul.bf16.gmra.mxu0 %v1115
      %v1459 = vpop.f32.mrf.mxu0
      %v1460 = vadd.f32 %v1371, %v1459
      %v1461 = vpop.f32.mrf.mxu0
      %v1462 = vadd.f32 %v1373, %v1461
      %1463 = vmatmul.bf16.gmra.mxu0 %v1123
      %v1464 = vpop.f32.mrf.mxu0
      %v1465 = vadd.f32 %v1376, %v1464
      %v1466 = vpop.f32.mrf.mxu0
      %v1467 = vadd.f32 %v1378, %v1466
      %1468 = vmatmul.bf16.gmra.mxu0 %v1131
      %v1469 = vpop.f32.mrf.mxu0
      %v1470 = vadd.f32 %v1381, %v1469
      %v1471 = vpop.f32.mrf.mxu0
      %v1472 = vadd.f32 %v1383, %v1471
      %1473 = vmatmul.bf16.gmra.mxu0 %v1139
      %v1474 = vpop.f32.mrf.mxu0
      %v1475 = vadd.f32 %v1386, %v1474
      %v1476 = vpop.f32.mrf.mxu0
      %v1477 = vadd.f32 %v1388, %v1476
      %1478 = vmatmul.bf16.gmra.mxu0 %v1147
      %v1479 = vpop.f32.mrf.mxu0
      %v1480 = vadd.f32 %v1391, %v1479
      %v1481 = vpop.f32.mrf.mxu0
      %v1482 = vadd.f32 %v1393, %v1481
      %1483 = vmatmul.bf16.gmra.mxu0 %v1155
      %v1484 = vpop.f32.mrf.mxu0
      %v1485 = vadd.f32 %v1396, %v1484
      %v1486 = vpop.f32.mrf.mxu0
      %v1487 = vadd.f32 %v1398, %v1486
      %1488 = vmatmul.bf16.gmra.mxu0 %v1163
      %v1489 = vpop.f32.mrf.mxu0
      %v1490 = vadd.f32 %v1401, %v1489
      %v1491 = vpop.f32.mrf.mxu0
      %v1492 = vadd.f32 %v1403, %v1491
      %1493 = vmatmul.bf16.gmra.mxu0 %v1171
      %v1494 = vpop.f32.mrf.mxu0
      %v1495 = vadd.f32 %v1406, %v1494
      %v1496 = vpop.f32.mrf.mxu0
      %v1497 = vadd.f32 %v1408, %v1496
      %1498 = vmatmul.bf16.gmra.mxu0 %v1179
      %v1499 = vpop.f32.mrf.mxu0
      %v1500 = vadd.f32 %v1411, %v1499
      %v1501 = vpop.f32.mrf.mxu0
      %v1502 = vadd.f32 %v1413, %v1501
      %1503 = vmatmul.bf16.gmra.mxu0 %v1187
      %v1504 = vpop.f32.mrf.mxu0
      %v1505 = vadd.f32 %v1416, %v1504
      %v1506 = vpop.f32.mrf.mxu0
      %v1507 = vadd.f32 %v1418, %v1506
      %1508 = vmatmul.bf16.gmra.mxu0 %v1195
      %v1509 = vpop.f32.mrf.mxu0
      %v1510 = vadd.f32 %v1421, %v1509
      %v1511 = vpop.f32.mrf.mxu0
      %v1512 = vadd.f32 %v1423, %v1511
      %1513 = vmatmul.bf16.gmra.mxu0 %v1203
      %v1514 = vpop.f32.mrf.mxu0
      %v1515 = vadd.f32 %v1426, %v1514
      %v1516 = vpop.f32.mrf.mxu0
      %v1517 = vadd.f32 %v1428, %v1516
      %1518 = vmatmul.bf16.gmra.mxu0 %v1211
      %v1519 = vpop.f32.mrf.mxu0
      %v1520 = vadd.f32 %v1431, %v1519
      %v1521 = vpop.f32.mrf.mxu0
      %v1522 = vadd.f32 %v1433, %v1521
      %1523 = vdwg.mxu0
      %1524 = vmatpush.bf16.msra.mxu0 %v496
      %1525 = vmatpush.bf16.msra.mxu0 %v494
      %1526 = vmatpush.bf16.msra.mxu0 %v492
      %1527 = vmatpush.bf16.msra.mxu0 %v490
      %1528 = vmatpush.bf16.msra.mxu0 %v488
      %1529 = vmatpush.bf16.msra.mxu0 %v486
      %1530 = vmatpush.bf16.msra.mxu0 %v484
      %1531 = vmatpush.bf16.msra.mxu0 %v482
      %1532 = vmatmul.bf16.gmra.mxu0 %v1092
      %v1533 = vpop.f32.mrf.mxu0
      %v1534 = vadd.f32 %v1445, %v1533
      %v1535 = vpop.f32.mrf.mxu0
      %v1536 = vadd.f32 %v1447, %v1535
      %1537 = vmatmul.bf16.gmra.mxu0 %v1100
      %v1538 = vpop.f32.mrf.mxu0
      %v1539 = vadd.f32 %v1450, %v1538
      %v1540 = vpop.f32.mrf.mxu0
      %v1541 = vadd.f32 %v1452, %v1540
      %1542 = vmatmul.bf16.gmra.mxu0 %v1108
      %v1543 = vpop.f32.mrf.mxu0
      %v1544 = vadd.f32 %v1455, %v1543
      %v1545 = vpop.f32.mrf.mxu0
      %v1546 = vadd.f32 %v1457, %v1545
      %1547 = vmatmul.bf16.gmra.mxu0 %v1116
      %v1548 = vpop.f32.mrf.mxu0
      %v1549 = vadd.f32 %v1460, %v1548
      %v1550 = vpop.f32.mrf.mxu0
      %v1551 = vadd.f32 %v1462, %v1550
      %1552 = vmatmul.bf16.gmra.mxu0 %v1124
      %v1553 = vpop.f32.mrf.mxu0
      %v1554 = vadd.f32 %v1465, %v1553
      %v1555 = vpop.f32.mrf.mxu0
      %v1556 = vadd.f32 %v1467, %v1555
      %1557 = vmatmul.bf16.gmra.mxu0 %v1132
      %v1558 = vpop.f32.mrf.mxu0
      %v1559 = vadd.f32 %v1470, %v1558
      %v1560 = vpop.f32.mrf.mxu0
      %v1561 = vadd.f32 %v1472, %v1560
      %1562 = vmatmul.bf16.gmra.mxu0 %v1140
      %v1563 = vpop.f32.mrf.mxu0
      %v1564 = vadd.f32 %v1475, %v1563
      %v1565 = vpop.f32.mrf.mxu0
      %v1566 = vadd.f32 %v1477, %v1565
      %1567 = vmatmul.bf16.gmra.mxu0 %v1148
      %v1568 = vpop.f32.mrf.mxu0
      %v1569 = vadd.f32 %v1480, %v1568
      %v1570 = vpop.f32.mrf.mxu0
      %v1571 = vadd.f32 %v1482, %v1570
      %1572 = vmatmul.bf16.gmra.mxu0 %v1156
      %v1573 = vpop.f32.mrf.mxu0
      %v1574 = vadd.f32 %v1485, %v1573
      %v1575 = vpop.f32.mrf.mxu0
      %v1576 = vadd.f32 %v1487, %v1575
      %1577 = vmatmul.bf16.gmra.mxu0 %v1164
      %v1578 = vpop.f32.mrf.mxu0
      %v1579 = vadd.f32 %v1490, %v1578
      %v1580 = vpop.f32.mrf.mxu0
      %v1581 = vadd.f32 %v1492, %v1580
      %1582 = vmatmul.bf16.gmra.mxu0 %v1172
      %v1583 = vpop.f32.mrf.mxu0
      %v1584 = vadd.f32 %v1495, %v1583
      %v1585 = vpop.f32.mrf.mxu0
      %v1586 = vadd.f32 %v1497, %v1585
      %1587 = vmatmul.bf16.gmra.mxu0 %v1180
      %v1588 = vpop.f32.mrf.mxu0
      %v1589 = vadd.f32 %v1500, %v1588
      %v1590 = vpop.f32.mrf.mxu0
      %v1591 = vadd.f32 %v1502, %v1590
      %1592 = vmatmul.bf16.gmra.mxu0 %v1188
      %v1593 = vpop.f32.mrf.mxu0
      %v1594 = vadd.f32 %v1505, %v1593
      %v1595 = vpop.f32.mrf.mxu0
      %v1596 = vadd.f32 %v1507, %v1595
      %1597 = vmatmul.bf16.gmra.mxu0 %v1196
      %v1598 = vpop.f32.mrf.mxu0
      %v1599 = vadd.f32 %v1510, %v1598
      %v1600 = vpop.f32.mrf.mxu0
      %v1601 = vadd.f32 %v1512, %v1600
      %1602 = vmatmul.bf16.gmra.mxu0 %v1204
      %v1603 = vpop.f32.mrf.mxu0
      %v1604 = vadd.f32 %v1515, %v1603
      %v1605 = vpop.f32.mrf.mxu0
      %v1606 = vadd.f32 %v1517, %v1605
      %1607 = vmatmul.bf16.gmra.mxu0 %v1212
      %v1608 = vpop.f32.mrf.mxu0
      %v1609 = vadd.f32 %v1520, %v1608
      %v1610 = vpop.f32.mrf.mxu0
      %v1611 = vadd.f32 %v1522, %v1610
      %1612 = vdwg.mxu0
      %1613 = vmatpush.bf16.msra.mxu0 %v512
      %1614 = vmatpush.bf16.msra.mxu0 %v510
      %1615 = vmatpush.bf16.msra.mxu0 %v508
      %1616 = vmatpush.bf16.msra.mxu0 %v506
      %1617 = vmatpush.bf16.msra.mxu0 %v504
      %1618 = vmatpush.bf16.msra.mxu0 %v502
      %1619 = vmatpush.bf16.msra.mxu0 %v500
      %1620 = vmatpush.bf16.msra.mxu0 %v498
      %1621 = vmatmul.bf16.gmra.mxu0 %v1093
      %v1622 = vpop.f32.mrf.mxu0
      %v1623 = vadd.f32 %v1534, %v1622
      %v1624 = vpop.f32.mrf.mxu0
      %v1625 = vadd.f32 %v1536, %v1624
      %1626 = vmatmul.bf16.gmra.mxu0 %v1101
      %v1627 = vpop.f32.mrf.mxu0
      %v1628 = vadd.f32 %v1539, %v1627
      %v1629 = vpop.f32.mrf.mxu0
      %v1630 = vadd.f32 %v1541, %v1629
      %1631 = vmatmul.bf16.gmra.mxu0 %v1109
      %v1632 = vpop.f32.mrf.mxu0
      %v1633 = vadd.f32 %v1544, %v1632
      %v1634 = vpop.f32.mrf.mxu0
      %v1635 = vadd.f32 %v1546, %v1634
      %1636 = vmatmul.bf16.gmra.mxu0 %v1117
      %v1637 = vpop.f32.mrf.mxu0
      %v1638 = vadd.f32 %v1549, %v1637
      %v1639 = vpop.f32.mrf.mxu0
      %v1640 = vadd.f32 %v1551, %v1639
      %1641 = vmatmul.bf16.gmra.mxu0 %v1125
      %v1642 = vpop.f32.mrf.mxu0
      %v1643 = vadd.f32 %v1554, %v1642
      %v1644 = vpop.f32.mrf.mxu0
      %v1645 = vadd.f32 %v1556, %v1644
      %1646 = vmatmul.bf16.gmra.mxu0 %v1133
      %v1647 = vpop.f32.mrf.mxu0
      %v1648 = vadd.f32 %v1559, %v1647
      %v1649 = vpop.f32.mrf.mxu0
      %v1650 = vadd.f32 %v1561, %v1649
      %1651 = vmatmul.bf16.gmra.mxu0 %v1141
      %v1652 = vpop.f32.mrf.mxu0
      %v1653 = vadd.f32 %v1564, %v1652
      %v1654 = vpop.f32.mrf.mxu0
      %v1655 = vadd.f32 %v1566, %v1654
      %1656 = vmatmul.bf16.gmra.mxu0 %v1149
      %v1657 = vpop.f32.mrf.mxu0
      %v1658 = vadd.f32 %v1569, %v1657
      %v1659 = vpop.f32.mrf.mxu0
      %v1660 = vadd.f32 %v1571, %v1659
      %1661 = vmatmul.bf16.gmra.mxu0 %v1157
      %v1662 = vpop.f32.mrf.mxu0
      %v1663 = vadd.f32 %v1574, %v1662
      %v1664 = vpop.f32.mrf.mxu0
      %v1665 = vadd.f32 %v1576, %v1664
      %1666 = vmatmul.bf16.gmra.mxu0 %v1165
      %v1667 = vpop.f32.mrf.mxu0
      %v1668 = vadd.f32 %v1579, %v1667
      %v1669 = vpop.f32.mrf.mxu0
      %v1670 = vadd.f32 %v1581, %v1669
      %1671 = vmatmul.bf16.gmra.mxu0 %v1173
      %v1672 = vpop.f32.mrf.mxu0
      %v1673 = vadd.f32 %v1584, %v1672
      %v1674 = vpop.f32.mrf.mxu0
      %v1675 = vadd.f32 %v1586, %v1674
      %1676 = vmatmul.bf16.gmra.mxu0 %v1181
      %v1677 = vpop.f32.mrf.mxu0
      %v1678 = vadd.f32 %v1589, %v1677
      %v1679 = vpop.f32.mrf.mxu0
      %v1680 = vadd.f32 %v1591, %v1679
      %1681 = vmatmul.bf16.gmra.mxu0 %v1189
      %v1682 = vpop.f32.mrf.mxu0
      %v1683 = vadd.f32 %v1594, %v1682
      %v1684 = vpop.f32.mrf.mxu0
      %v1685 = vadd.f32 %v1596, %v1684
      %1686 = vmatmul.bf16.gmra.mxu0 %v1197
      %v1687 = vpop.f32.mrf.mxu0
      %v1688 = vadd.f32 %v1599, %v1687
      %v1689 = vpop.f32.mrf.mxu0
      %v1690 = vadd.f32 %v1601, %v1689
      %1691 = vmatmul.bf16.gmra.mxu0 %v1205
      %v1692 = vpop.f32.mrf.mxu0
      %v1693 = vadd.f32 %v1604, %v1692
      %v1694 = vpop.f32.mrf.mxu0
      %v1695 = vadd.f32 %v1606, %v1694
      %1696 = vmatmul.bf16.gmra.mxu0 %v1213
      %v1697 = vpop.f32.mrf.mxu0
      %v1698 = vadd.f32 %v1609, %v1697
      %v1699 = vpop.f32.mrf.mxu0
      %v1700 = vadd.f32 %v1611, %v1699
      %1701 = vdwg.mxu0
      %1702 = vmatpush.bf16.msra.mxu0 %v528
      %1703 = vmatpush.bf16.msra.mxu0 %v526
      %1704 = vmatpush.bf16.msra.mxu0 %v524
      %1705 = vmatpush.bf16.msra.mxu0 %v522
      %1706 = vmatpush.bf16.msra.mxu0 %v520
      %1707 = vmatpush.bf16.msra.mxu0 %v518
      %1708 = vmatpush.bf16.msra.mxu0 %v516
      %1709 = vmatpush.bf16.msra.mxu0 %v514
      %1710 = vmatmul.bf16.gmra.mxu0 %v1094
      %v1711 = vpop.f32.mrf.mxu0
      %v1712 = vadd.f32 %v1623, %v1711
      %v1713 = vpop.f32.mrf.mxu0
      %v1714 = vadd.f32 %v1625, %v1713
      %1715 = vmatmul.bf16.gmra.mxu0 %v1102
      %v1716 = vpop.f32.mrf.mxu0
      %v1717 = vadd.f32 %v1628, %v1716
      %v1718 = vpop.f32.mrf.mxu0
      %v1719 = vadd.f32 %v1630, %v1718
      %1720 = vmatmul.bf16.gmra.mxu0 %v1110
      %v1721 = vpop.f32.mrf.mxu0
      %v1722 = vadd.f32 %v1633, %v1721
      %v1723 = vpop.f32.mrf.mxu0
      %v1724 = vadd.f32 %v1635, %v1723
      %1725 = vmatmul.bf16.gmra.mxu0 %v1118
      %v1726 = vpop.f32.mrf.mxu0
      %v1727 = vadd.f32 %v1638, %v1726
      %v1728 = vpop.f32.mrf.mxu0
      %v1729 = vadd.f32 %v1640, %v1728
      %1730 = vmatmul.bf16.gmra.mxu0 %v1126
      %v1731 = vpop.f32.mrf.mxu0
      %v1732 = vadd.f32 %v1643, %v1731
      %v1733 = vpop.f32.mrf.mxu0
      %v1734 = vadd.f32 %v1645, %v1733
      %1735 = vmatmul.bf16.gmra.mxu0 %v1134
      %v1736 = vpop.f32.mrf.mxu0
      %v1737 = vadd.f32 %v1648, %v1736
      %v1738 = vpop.f32.mrf.mxu0
      %v1739 = vadd.f32 %v1650, %v1738
      %1740 = vmatmul.bf16.gmra.mxu0 %v1142
      %v1741 = vpop.f32.mrf.mxu0
      %v1742 = vadd.f32 %v1653, %v1741
      %v1743 = vpop.f32.mrf.mxu0
      %v1744 = vadd.f32 %v1655, %v1743
      %1745 = vmatmul.bf16.gmra.mxu0 %v1150
      %v1746 = vpop.f32.mrf.mxu0
      %v1747 = vadd.f32 %v1658, %v1746
      %v1748 = vpop.f32.mrf.mxu0
      %v1749 = vadd.f32 %v1660, %v1748
      %1750 = vmatmul.bf16.gmra.mxu0 %v1158
      %v1751 = vpop.f32.mrf.mxu0
      %v1752 = vadd.f32 %v1663, %v1751
      %v1753 = vpop.f32.mrf.mxu0
      %v1754 = vadd.f32 %v1665, %v1753
      %1755 = vmatmul.bf16.gmra.mxu0 %v1166
      %v1756 = vpop.f32.mrf.mxu0
      %v1757 = vadd.f32 %v1668, %v1756
      %v1758 = vpop.f32.mrf.mxu0
      %v1759 = vadd.f32 %v1670, %v1758
      %1760 = vmatmul.bf16.gmra.mxu0 %v1174
      %v1761 = vpop.f32.mrf.mxu0
      %v1762 = vadd.f32 %v1673, %v1761
      %v1763 = vpop.f32.mrf.mxu0
      %v1764 = vadd.f32 %v1675, %v1763
      %1765 = vmatmul.bf16.gmra.mxu0 %v1182
      %v1766 = vpop.f32.mrf.mxu0
      %v1767 = vadd.f32 %v1678, %v1766
      %v1768 = vpop.f32.mrf.mxu0
      %v1769 = vadd.f32 %v1680, %v1768
      %1770 = vmatmul.bf16.gmra.mxu0 %v1190
      %v1771 = vpop.f32.mrf.mxu0
      %v1772 = vadd.f32 %v1683, %v1771
      %v1773 = vpop.f32.mrf.mxu0
      %v1774 = vadd.f32 %v1685, %v1773
      %1775 = vmatmul.bf16.gmra.mxu0 %v1198
      %v1776 = vpop.f32.mrf.mxu0
      %v1777 = vadd.f32 %v1688, %v1776
      %v1778 = vpop.f32.mrf.mxu0
      %v1779 = vadd.f32 %v1690, %v1778
      %1780 = vmatmul.bf16.gmra.mxu0 %v1206
      %v1781 = vpop.f32.mrf.mxu0
      %v1782 = vadd.f32 %v1693, %v1781
      %v1783 = vpop.f32.mrf.mxu0
      %v1784 = vadd.f32 %v1695, %v1783
      %1785 = vmatmul.bf16.gmra.mxu0 %v1214
      %v1786 = vpop.f32.mrf.mxu0
      %v1787 = vadd.f32 %v1698, %v1786
      %v1788 = vpop.f32.mrf.mxu0
      %v1789 = vadd.f32 %v1700, %v1788
      %1790 = vdwg.mxu0
      %1791 = vmatpush.bf16.msra.mxu0 %v544
      %1792 = vmatpush.bf16.msra.mxu0 %v542
      %1793 = vmatpush.bf16.msra.mxu0 %v540
      %1794 = vmatpush.bf16.msra.mxu0 %v538
      %1795 = vmatpush.bf16.msra.mxu0 %v536
      %1796 = vmatpush.bf16.msra.mxu0 %v534
      %1797 = vmatpush.bf16.msra.mxu0 %v532
      %1798 = vmatpush.bf16.msra.mxu0 %v530
      %1799 = vmatmul.bf16.gmra.mxu0 %v1095
      %v1800 = vpop.f32.mrf.mxu0
      %v1801 = vadd.f32 %v1712, %v1800
      %v1802 = vpop.f32.mrf.mxu0
      %v1803 = vadd.f32 %v1714, %v1802
      %1804 = vmatmul.bf16.gmra.mxu0 %v1103
      %v1805 = vpop.f32.mrf.mxu0
      %v1806 = vadd.f32 %v1717, %v1805
      %v1807 = vpop.f32.mrf.mxu0
      %v1808 = vadd.f32 %v1719, %v1807
      %1809 = vmatmul.bf16.gmra.mxu0 %v1111
      %v1810 = vpop.f32.mrf.mxu0
      %v1811 = vadd.f32 %v1722, %v1810
      %v1812 = vpop.f32.mrf.mxu0
      %v1813 = vadd.f32 %v1724, %v1812
      %1814 = vmatmul.bf16.gmra.mxu0 %v1119
      %v1815 = vpop.f32.mrf.mxu0
      %v1816 = vadd.f32 %v1727, %v1815
      %v1817 = vpop.f32.mrf.mxu0
      %v1818 = vadd.f32 %v1729, %v1817
      %1819 = vmatmul.bf16.gmra.mxu0 %v1127
      %v1820 = vpop.f32.mrf.mxu0
      %v1821 = vadd.f32 %v1732, %v1820
      %v1822 = vpop.f32.mrf.mxu0
      %v1823 = vadd.f32 %v1734, %v1822
      %1824 = vmatmul.bf16.gmra.mxu0 %v1135
      %v1825 = vpop.f32.mrf.mxu0
      %v1826 = vadd.f32 %v1737, %v1825
      %v1827 = vpop.f32.mrf.mxu0
      %v1828 = vadd.f32 %v1739, %v1827
      %1829 = vmatmul.bf16.gmra.mxu0 %v1143
      %v1830 = vpop.f32.mrf.mxu0
      %v1831 = vadd.f32 %v1742, %v1830
      %v1832 = vpop.f32.mrf.mxu0
      %v1833 = vadd.f32 %v1744, %v1832
      %1834 = vmatmul.bf16.gmra.mxu0 %v1151
      %v1835 = vpop.f32.mrf.mxu0
      %v1836 = vadd.f32 %v1747, %v1835
      %v1837 = vpop.f32.mrf.mxu0
      %v1838 = vadd.f32 %v1749, %v1837
      %1839 = vmatmul.bf16.gmra.mxu0 %v1159
      %v1840 = vpop.f32.mrf.mxu0
      %v1841 = vadd.f32 %v1752, %v1840
      %v1842 = vpop.f32.mrf.mxu0
      %v1843 = vadd.f32 %v1754, %v1842
      %1844 = vmatmul.bf16.gmra.mxu0 %v1167
      %v1845 = vpop.f32.mrf.mxu0
      %v1846 = vadd.f32 %v1757, %v1845
      %v1847 = vpop.f32.mrf.mxu0
      %v1848 = vadd.f32 %v1759, %v1847
      %1849 = vmatmul.bf16.gmra.mxu0 %v1175
      %v1850 = vpop.f32.mrf.mxu0
      %v1851 = vadd.f32 %v1762, %v1850
      %v1852 = vpop.f32.mrf.mxu0
      %v1853 = vadd.f32 %v1764, %v1852
      %1854 = vmatmul.bf16.gmra.mxu0 %v1183
      %v1855 = vpop.f32.mrf.mxu0
      %v1856 = vadd.f32 %v1767, %v1855
      %v1857 = vpop.f32.mrf.mxu0
      %v1858 = vadd.f32 %v1769, %v1857
      %1859 = vmatmul.bf16.gmra.mxu0 %v1191
      %v1860 = vpop.f32.mrf.mxu0
      %v1861 = vadd.f32 %v1772, %v1860
      %v1862 = vpop.f32.mrf.mxu0
      %v1863 = vadd.f32 %v1774, %v1862
      %1864 = vmatmul.bf16.gmra.mxu0 %v1199
      %v1865 = vpop.f32.mrf.mxu0
      %v1866 = vadd.f32 %v1777, %v1865
      %v1867 = vpop.f32.mrf.mxu0
      %v1868 = vadd.f32 %v1779, %v1867
      %1869 = vmatmul.bf16.gmra.mxu0 %v1207
      %v1870 = vpop.f32.mrf.mxu0
      %v1871 = vadd.f32 %v1782, %v1870
      %v1872 = vpop.f32.mrf.mxu0
      %v1873 = vadd.f32 %v1784, %v1872
      %1874 = vmatmul.bf16.gmra.mxu0 %v1215
      %v1875 = vpop.f32.mrf.mxu0
      %v1876 = vadd.f32 %v1787, %v1875
      %v1877 = vpop.f32.mrf.mxu0
      %v1878 = vadd.f32 %v1789, %v1877
      %1879 = vdwg.mxu0
      %1880 = vmatpush.bf16.msra.mxu0 %v560
      %1881 = vmatpush.bf16.msra.mxu0 %v558
      %1882 = vmatpush.bf16.msra.mxu0 %v556
      %1883 = vmatpush.bf16.msra.mxu0 %v554
      %1884 = vmatpush.bf16.msra.mxu0 %v552
      %1885 = vmatpush.bf16.msra.mxu0 %v550
      %1886 = vmatpush.bf16.msra.mxu0 %v548
      %1887 = vmatpush.bf16.msra.mxu0 %v546
      %1888 = vmatmul.bf16.gmra.mxu0 %v1096
      %v1889 = vpop.f32.mrf.mxu0
      %v1890 = vadd.f32 %v1801, %v1889
      %v1891 = vpop.f32.mrf.mxu0
      %v1892 = vadd.f32 %v1803, %v1891
      %1893 = vmatmul.bf16.gmra.mxu0 %v1104
      %v1894 = vpop.f32.mrf.mxu0
      %v1895 = vadd.f32 %v1806, %v1894
      %v1896 = vpop.f32.mrf.mxu0
      %v1897 = vadd.f32 %v1808, %v1896
      %1898 = vmatmul.bf16.gmra.mxu0 %v1112
      %v1899 = vpop.f32.mrf.mxu0
      %v1900 = vadd.f32 %v1811, %v1899
      %v1901 = vpop.f32.mrf.mxu0
      %v1902 = vadd.f32 %v1813, %v1901
      %1903 = vmatmul.bf16.gmra.mxu0 %v1120
      %v1904 = vpop.f32.mrf.mxu0
      %v1905 = vadd.f32 %v1816, %v1904
      %v1906 = vpop.f32.mrf.mxu0
      %v1907 = vadd.f32 %v1818, %v1906
      %1908 = vmatmul.bf16.gmra.mxu0 %v1128
      %v1909 = vpop.f32.mrf.mxu0
      %v1910 = vadd.f32 %v1821, %v1909
      %v1911 = vpop.f32.mrf.mxu0
      %v1912 = vadd.f32 %v1823, %v1911
      %1913 = vmatmul.bf16.gmra.mxu0 %v1136
      %v1914 = vpop.f32.mrf.mxu0
      %v1915 = vadd.f32 %v1826, %v1914
      %v1916 = vpop.f32.mrf.mxu0
      %v1917 = vadd.f32 %v1828, %v1916
      %1918 = vmatmul.bf16.gmra.mxu0 %v1144
      %v1919 = vpop.f32.mrf.mxu0
      %v1920 = vadd.f32 %v1831, %v1919
      %v1921 = vpop.f32.mrf.mxu0
      %v1922 = vadd.f32 %v1833, %v1921
      %1923 = vmatmul.bf16.gmra.mxu0 %v1152
      %v1924 = vpop.f32.mrf.mxu0
      %v1925 = vadd.f32 %v1836, %v1924
      %v1926 = vpop.f32.mrf.mxu0
      %v1927 = vadd.f32 %v1838, %v1926
      %1928 = vmatmul.bf16.gmra.mxu0 %v1160
      %v1929 = vpop.f32.mrf.mxu0
      %v1930 = vadd.f32 %v1841, %v1929
      %v1931 = vpop.f32.mrf.mxu0
      %v1932 = vadd.f32 %v1843, %v1931
      %1933 = vmatmul.bf16.gmra.mxu0 %v1168
      %v1934 = vpop.f32.mrf.mxu0
      %v1935 = vadd.f32 %v1846, %v1934
      %v1936 = vpop.f32.mrf.mxu0
      %v1937 = vadd.f32 %v1848, %v1936
      %1938 = vmatmul.bf16.gmra.mxu0 %v1176
      %v1939 = vpop.f32.mrf.mxu0
      %v1940 = vadd.f32 %v1851, %v1939
      %v1941 = vpop.f32.mrf.mxu0
      %v1942 = vadd.f32 %v1853, %v1941
      %1943 = vmatmul.bf16.gmra.mxu0 %v1184
      %v1944 = vpop.f32.mrf.mxu0
      %v1945 = vadd.f32 %v1856, %v1944
      %v1946 = vpop.f32.mrf.mxu0
      %v1947 = vadd.f32 %v1858, %v1946
      %1948 = vmatmul.bf16.gmra.mxu0 %v1192
      %v1949 = vpop.f32.mrf.mxu0
      %v1950 = vadd.f32 %v1861, %v1949
      %v1951 = vpop.f32.mrf.mxu0
      %v1952 = vadd.f32 %v1863, %v1951
      %1953 = vmatmul.bf16.gmra.mxu0 %v1200
      %v1954 = vpop.f32.mrf.mxu0
      %v1955 = vadd.f32 %v1866, %v1954
      %v1956 = vpop.f32.mrf.mxu0
      %v1957 = vadd.f32 %v1868, %v1956
      %1958 = vmatmul.bf16.gmra.mxu0 %v1208
      %v1959 = vpop.f32.mrf.mxu0
      %v1960 = vadd.f32 %v1871, %v1959
      %v1961 = vpop.f32.mrf.mxu0
      %v1962 = vadd.f32 %v1873, %v1961
      %1963 = vmatmul.bf16.gmra.mxu0 %v1216
      %v1964 = vpop.f32.mrf.mxu0
      %v1965 = vadd.f32 %v1876, %v1964
      %v1966 = vpop.f32.mrf.mxu0
      %v1967 = vadd.f32 %v1878, %v1966
      %1968 = vdwg.mxu0
      %1969 = vmatpush.bf16.msra.mxu0 %v576
      %1970 = vmatpush.bf16.msra.mxu0 %v574
      %1971 = vmatpush.bf16.msra.mxu0 %v572
      %1972 = vmatpush.bf16.msra.mxu0 %v570
      %1973 = vmatpush.bf16.msra.mxu0 %v568
      %1974 = vmatpush.bf16.msra.mxu0 %v566
      %1975 = vmatpush.bf16.msra.mxu0 %v564
      %1976 = vmatpush.bf16.msra.mxu0 %v562
      %1977 = vmatmul.bf16.gmra.mxu0 %v1097
      %v1978 = vpop.f32.mrf.mxu0
      %v1979 = vadd.f32 %v1890, %v1978
      %v1980 = vpop.f32.mrf.mxu0
      %v1981 = vadd.f32 %v1892, %v1980
      %1982 = vmatmul.bf16.gmra.mxu0 %v1105
      %v1983 = vpop.f32.mrf.mxu0
      %v1984 = vadd.f32 %v1895, %v1983
      %v1985 = vpop.f32.mrf.mxu0
      %v1986 = vadd.f32 %v1897, %v1985
      %1987 = vmatmul.bf16.gmra.mxu0 %v1113
      %v1988 = vpop.f32.mrf.mxu0
      %v1989 = vadd.f32 %v1900, %v1988
      %v1990 = vpop.f32.mrf.mxu0
      %v1991 = vadd.f32 %v1902, %v1990
      %1992 = vmatmul.bf16.gmra.mxu0 %v1121
      %v1993 = vpop.f32.mrf.mxu0
      %v1994 = vadd.f32 %v1905, %v1993
      %v1995 = vpop.f32.mrf.mxu0
      %v1996 = vadd.f32 %v1907, %v1995
      %1997 = vmatmul.bf16.gmra.mxu0 %v1129
      %v1998 = vpop.f32.mrf.mxu0
      %v1999 = vadd.f32 %v1910, %v1998
      %v2000 = vpop.f32.mrf.mxu0
      %v2001 = vadd.f32 %v1912, %v2000
      %2002 = vmatmul.bf16.gmra.mxu0 %v1137
      %v2003 = vpop.f32.mrf.mxu0
      %v2004 = vadd.f32 %v1915, %v2003
      %v2005 = vpop.f32.mrf.mxu0
      %v2006 = vadd.f32 %v1917, %v2005
      %2007 = vmatmul.bf16.gmra.mxu0 %v1145
      %v2008 = vpop.f32.mrf.mxu0
      %v2009 = vadd.f32 %v1920, %v2008
      %v2010 = vpop.f32.mrf.mxu0
      %v2011 = vadd.f32 %v1922, %v2010
      %2012 = vmatmul.bf16.gmra.mxu0 %v1153
      %v2013 = vpop.f32.mrf.mxu0
      %v2014 = vadd.f32 %v1925, %v2013
      %v2015 = vpop.f32.mrf.mxu0
      %v2016 = vadd.f32 %v1927, %v2015
      %2017 = vmatmul.bf16.gmra.mxu0 %v1161
      %v2018 = vpop.f32.mrf.mxu0
      %v2019 = vadd.f32 %v1930, %v2018
      %v2020 = vpop.f32.mrf.mxu0
      %v2021 = vadd.f32 %v1932, %v2020
      %2022 = vmatmul.bf16.gmra.mxu0 %v1169
      %v2023 = vpop.f32.mrf.mxu0
      %v2024 = vadd.f32 %v1935, %v2023
      %v2025 = vpop.f32.mrf.mxu0
      %v2026 = vadd.f32 %v1937, %v2025
      %2027 = vmatmul.bf16.gmra.mxu0 %v1177
      %v2028 = vpop.f32.mrf.mxu0
      %v2029 = vadd.f32 %v1940, %v2028
      %v2030 = vpop.f32.mrf.mxu0
      %v2031 = vadd.f32 %v1942, %v2030
      %2032 = vmatmul.bf16.gmra.mxu0 %v1185
      %v2033 = vpop.f32.mrf.mxu0
      %v2034 = vadd.f32 %v1945, %v2033
      %v2035 = vpop.f32.mrf.mxu0
      %v2036 = vadd.f32 %v1947, %v2035
      %2037 = vmatmul.bf16.gmra.mxu0 %v1193
      %v2038 = vpop.f32.mrf.mxu0
      %v2039 = vadd.f32 %v1950, %v2038
      %v2040 = vpop.f32.mrf.mxu0
      %v2041 = vadd.f32 %v1952, %v2040
      %2042 = vmatmul.bf16.gmra.mxu0 %v1201
      %v2043 = vpop.f32.mrf.mxu0
      %v2044 = vadd.f32 %v1955, %v2043
      %v2045 = vpop.f32.mrf.mxu0
      %v2046 = vadd.f32 %v1957, %v2045
      %2047 = vmatmul.bf16.gmra.mxu0 %v1209
      %v2048 = vpop.f32.mrf.mxu0
      %v2049 = vadd.f32 %v1960, %v2048
      %v2050 = vpop.f32.mrf.mxu0
      %v2051 = vadd.f32 %v1962, %v2050
      %2052 = vmatmul.bf16.gmra.mxu0 %v1217
      %v2053 = vpop.f32.mrf.mxu0
      %v2054 = vadd.f32 %v1965, %v2053
      %v2055 = vpop.f32.mrf.mxu0
      %v2056 = vadd.f32 %v1967, %v2055
      %2057 = vdwg.mxu0
      %2058 = vmatpush.bf16.msra.mxu0 %v465
      %2059 = vmatpush.bf16.msra.mxu0 %v463
      %2060 = vmatpush.bf16.msra.mxu0 %v461
      %2061 = vmatpush.bf16.msra.mxu0 %v459
      %2062 = vmatpush.bf16.msra.mxu0 %v457
      %2063 = vmatpush.bf16.msra.mxu0 %v455
      %2064 = vmatpush.bf16.msra.mxu0 %v453
      %2065 = vmatpush.bf16.msra.mxu0 %v451
      %2066 = vmatmul.bf16.gmra.mxu0 %v1090
      %v2067 = vpop.f32.mrf.mxu0
      %v2068 = vadd.f32 0.0, %v2067
      %v2069 = vpop.f32.mrf.mxu0
      %v2070 = vadd.f32 0.0, %v2069
      %2071 = vmatmul.bf16.gmra.mxu0 %v1098
      %v2072 = vpop.f32.mrf.mxu0
      %v2073 = vadd.f32 0.0, %v2072
      %v2074 = vpop.f32.mrf.mxu0
      %v2075 = vadd.f32 0.0, %v2074
      %2076 = vmatmul.bf16.gmra.mxu0 %v1106
      %v2077 = vpop.f32.mrf.mxu0
      %v2078 = vadd.f32 0.0, %v2077
      %v2079 = vpop.f32.mrf.mxu0
      %v2080 = vadd.f32 0.0, %v2079
      %2081 = vmatmul.bf16.gmra.mxu0 %v1114
      %v2082 = vpop.f32.mrf.mxu0
      %v2083 = vadd.f32 0.0, %v2082
      %v2084 = vpop.f32.mrf.mxu0
      %v2085 = vadd.f32 0.0, %v2084
      %2086 = vmatmul.bf16.gmra.mxu0 %v1122
      %v2087 = vpop.f32.mrf.mxu0
      %v2088 = vadd.f32 0.0, %v2087
      %v2089 = vpop.f32.mrf.mxu0
      %v2090 = vadd.f32 0.0, %v2089
      %2091 = vmatmul.bf16.gmra.mxu0 %v1130
      %v2092 = vpop.f32.mrf.mxu0
      %v2093 = vadd.f32 0.0, %v2092
      %v2094 = vpop.f32.mrf.mxu0
      %v2095 = vadd.f32 0.0, %v2094
      %2096 = vmatmul.bf16.gmra.mxu0 %v1138
      %v2097 = vpop.f32.mrf.mxu0
      %v2098 = vadd.f32 0.0, %v2097
      %v2099 = vpop.f32.mrf.mxu0
      %v2100 = vadd.f32 0.0, %v2099
      %2101 = vmatmul.bf16.gmra.mxu0 %v1146
      %v2102 = vpop.f32.mrf.mxu0
      %v2103 = vadd.f32 0.0, %v2102
      %v2104 = vpop.f32.mrf.mxu0
      %v2105 = vadd.f32 0.0, %v2104
      %2106 = vmatmul.bf16.gmra.mxu0 %v1154
      %v2107 = vpop.f32.mrf.mxu0
      %v2108 = vadd.f32 0.0, %v2107
      %v2109 = vpop.f32.mrf.mxu0
      %v2110 = vadd.f32 0.0, %v2109
      %2111 = vmatmul.bf16.gmra.mxu0 %v1162
      %v2112 = vpop.f32.mrf.mxu0
      %v2113 = vadd.f32 0.0, %v2112
      %v2114 = vpop.f32.mrf.mxu0
      %v2115 = vadd.f32 0.0, %v2114
      %2116 = vmatmul.bf16.gmra.mxu0 %v1170
      %v2117 = vpop.f32.mrf.mxu0
      %v2118 = vadd.f32 0.0, %v2117
      %v2119 = vpop.f32.mrf.mxu0
      %v2120 = vadd.f32 0.0, %v2119
      %2121 = vmatmul.bf16.gmra.mxu0 %v1178
      %v2122 = vpop.f32.mrf.mxu0
      %v2123 = vadd.f32 0.0, %v2122
      %v2124 = vpop.f32.mrf.mxu0
      %v2125 = vadd.f32 0.0, %v2124
      %2126 = vmatmul.bf16.gmra.mxu0 %v1186
      %v2127 = vpop.f32.mrf.mxu0
      %v2128 = vadd.f32 0.0, %v2127
      %v2129 = vpop.f32.mrf.mxu0
      %v2130 = vadd.f32 0.0, %v2129
      %2131 = vmatmul.bf16.gmra.mxu0 %v1194
      %v2132 = vpop.f32.mrf.mxu0
      %v2133 = vadd.f32 0.0, %v2132
      %v2134 = vpop.f32.mrf.mxu0
      %v2135 = vadd.f32 0.0, %v2134
      %2136 = vmatmul.bf16.gmra.mxu0 %v1202
      %v2137 = vpop.f32.mrf.mxu0
      %v2138 = vadd.f32 0.0, %v2137
      %v2139 = vpop.f32.mrf.mxu0
      %v2140 = vadd.f32 0.0, %v2139
      %2141 = vmatmul.bf16.gmra.mxu0 %v1210
      %v2142 = vpop.f32.mrf.mxu0
      %v2143 = vadd.f32 0.0, %v2142
      %v2144 = vpop.f32.mrf.mxu0
      %v2145 = vadd.f32 0.0, %v2144
      %2146 = vdwg.mxu0
      %2147 = vmatpush.bf16.msra.mxu0 %v481
      %2148 = vmatpush.bf16.msra.mxu0 %v479
      %2149 = vmatpush.bf16.msra.mxu0 %v477
      %2150 = vmatpush.bf16.msra.mxu0 %v475
      %2151 = vmatpush.bf16.msra.mxu0 %v473
      %2152 = vmatpush.bf16.msra.mxu0 %v471
      %2153 = vmatpush.bf16.msra.mxu0 %v469
      %2154 = vmatpush.bf16.msra.mxu0 %v467
      %2155 = vmatmul.bf16.gmra.mxu0 %v1091
      %v2156 = vpop.f32.mrf.mxu0
      %v2157 = vadd.f32 %v2068, %v2156
      %v2158 = vpop.f32.mrf.mxu0
      %v2159 = vadd.f32 %v2070, %v2158
      %2160 = vmatmul.bf16.gmra.mxu0 %v1099
      %v2161 = vpop.f32.mrf.mxu0
      %v2162 = vadd.f32 %v2073, %v2161
      %v2163 = vpop.f32.mrf.mxu0
      %v2164 = vadd.f32 %v2075, %v2163
      %2165 = vmatmul.bf16.gmra.mxu0 %v1107
      %v2166 = vpop.f32.mrf.mxu0
      %v2167 = vadd.f32 %v2078, %v2166
      %v2168 = vpop.f32.mrf.mxu0
      %v2169 = vadd.f32 %v2080, %v2168
      %2170 = vmatmul.bf16.gmra.mxu0 %v1115
      %v2171 = vpop.f32.mrf.mxu0
      %v2172 = vadd.f32 %v2083, %v2171
      %v2173 = vpop.f32.mrf.mxu0
      %v2174 = vadd.f32 %v2085, %v2173
      %2175 = vmatmul.bf16.gmra.mxu0 %v1123
      %v2176 = vpop.f32.mrf.mxu0
      %v2177 = vadd.f32 %v2088, %v2176
      %v2178 = vpop.f32.mrf.mxu0
      %v2179 = vadd.f32 %v2090, %v2178
      %2180 = vmatmul.bf16.gmra.mxu0 %v1131
      %v2181 = vpop.f32.mrf.mxu0
      %v2182 = vadd.f32 %v2093, %v2181
      %v2183 = vpop.f32.mrf.mxu0
      %v2184 = vadd.f32 %v2095, %v2183
      %2185 = vmatmul.bf16.gmra.mxu0 %v1139
      %v2186 = vpop.f32.mrf.mxu0
      %v2187 = vadd.f32 %v2098, %v2186
      %v2188 = vpop.f32.mrf.mxu0
      %v2189 = vadd.f32 %v2100, %v2188
      %2190 = vmatmul.bf16.gmra.mxu0 %v1147
      %v2191 = vpop.f32.mrf.mxu0
      %v2192 = vadd.f32 %v2103, %v2191
      %v2193 = vpop.f32.mrf.mxu0
      %v2194 = vadd.f32 %v2105, %v2193
      %2195 = vmatmul.bf16.gmra.mxu0 %v1155
      %v2196 = vpop.f32.mrf.mxu0
      %v2197 = vadd.f32 %v2108, %v2196
      %v2198 = vpop.f32.mrf.mxu0
      %v2199 = vadd.f32 %v2110, %v2198
      %2200 = vmatmul.bf16.gmra.mxu0 %v1163
      %v2201 = vpop.f32.mrf.mxu0
      %v2202 = vadd.f32 %v2113, %v2201
      %v2203 = vpop.f32.mrf.mxu0
      %v2204 = vadd.f32 %v2115, %v2203
      %2205 = vmatmul.bf16.gmra.mxu0 %v1171
      %v2206 = vpop.f32.mrf.mxu0
      %v2207 = vadd.f32 %v2118, %v2206
      %v2208 = vpop.f32.mrf.mxu0
      %v2209 = vadd.f32 %v2120, %v2208
      %2210 = vmatmul.bf16.gmra.mxu0 %v1179
      %v2211 = vpop.f32.mrf.mxu0
      %v2212 = vadd.f32 %v2123, %v2211
      %v2213 = vpop.f32.mrf.mxu0
      %v2214 = vadd.f32 %v2125, %v2213
      %2215 = vmatmul.bf16.gmra.mxu0 %v1187
      %v2216 = vpop.f32.mrf.mxu0
      %v2217 = vadd.f32 %v2128, %v2216
      %v2218 = vpop.f32.mrf.mxu0
      %v2219 = vadd.f32 %v2130, %v2218
      %2220 = vmatmul.bf16.gmra.mxu0 %v1195
      %v2221 = vpop.f32.mrf.mxu0
      %v2222 = vadd.f32 %v2133, %v2221
      %v2223 = vpop.f32.mrf.mxu0
      %v2224 = vadd.f32 %v2135, %v2223
      %2225 = vmatmul.bf16.gmra.mxu0 %v1203
      %v2226 = vpop.f32.mrf.mxu0
      %v2227 = vadd.f32 %v2138, %v2226
      %v2228 = vpop.f32.mrf.mxu0
      %v2229 = vadd.f32 %v2140, %v2228
      %2230 = vmatmul.bf16.gmra.mxu0 %v1211
      %v2231 = vpop.f32.mrf.mxu0
      %v2232 = vadd.f32 %v2143, %v2231
      %v2233 = vpop.f32.mrf.mxu0
      %v2234 = vadd.f32 %v2145, %v2233
      %2235 = vdwg.mxu0
      %2236 = vmatpush.bf16.msra.mxu0 %v497
      %2237 = vmatpush.bf16.msra.mxu0 %v495
      %2238 = vmatpush.bf16.msra.mxu0 %v493
      %2239 = vmatpush.bf16.msra.mxu0 %v491
      %2240 = vmatpush.bf16.msra.mxu0 %v489
      %2241 = vmatpush.bf16.msra.mxu0 %v487
      %2242 = vmatpush.bf16.msra.mxu0 %v485
      %2243 = vmatpush.bf16.msra.mxu0 %v483
      %2244 = vmatmul.bf16.gmra.mxu0 %v1092
      %v2245 = vpop.f32.mrf.mxu0
      %v2246 = vadd.f32 %v2157, %v2245
      %v2247 = vpop.f32.mrf.mxu0
      %v2248 = vadd.f32 %v2159, %v2247
      %2249 = vmatmul.bf16.gmra.mxu0 %v1100
      %v2250 = vpop.f32.mrf.mxu0
      %v2251 = vadd.f32 %v2162, %v2250
      %v2252 = vpop.f32.mrf.mxu0
      %v2253 = vadd.f32 %v2164, %v2252
      %2254 = vmatmul.bf16.gmra.mxu0 %v1108
      %v2255 = vpop.f32.mrf.mxu0
      %v2256 = vadd.f32 %v2167, %v2255
      %v2257 = vpop.f32.mrf.mxu0
      %v2258 = vadd.f32 %v2169, %v2257
      %2259 = vmatmul.bf16.gmra.mxu0 %v1116
      %v2260 = vpop.f32.mrf.mxu0
      %v2261 = vadd.f32 %v2172, %v2260
      %v2262 = vpop.f32.mrf.mxu0
      %v2263 = vadd.f32 %v2174, %v2262
      %2264 = vmatmul.bf16.gmra.mxu0 %v1124
      %v2265 = vpop.f32.mrf.mxu0
      %v2266 = vadd.f32 %v2177, %v2265
      %v2267 = vpop.f32.mrf.mxu0
      %v2268 = vadd.f32 %v2179, %v2267
      %2269 = vmatmul.bf16.gmra.mxu0 %v1132
      %v2270 = vpop.f32.mrf.mxu0
      %v2271 = vadd.f32 %v2182, %v2270
      %v2272 = vpop.f32.mrf.mxu0
      %v2273 = vadd.f32 %v2184, %v2272
      %2274 = vmatmul.bf16.gmra.mxu0 %v1140
      %v2275 = vpop.f32.mrf.mxu0
      %v2276 = vadd.f32 %v2187, %v2275
      %v2277 = vpop.f32.mrf.mxu0
      %v2278 = vadd.f32 %v2189, %v2277
      %2279 = vmatmul.bf16.gmra.mxu0 %v1148
      %v2280 = vpop.f32.mrf.mxu0
      %v2281 = vadd.f32 %v2192, %v2280
      %v2282 = vpop.f32.mrf.mxu0
      %v2283 = vadd.f32 %v2194, %v2282
      %2284 = vmatmul.bf16.gmra.mxu0 %v1156
      %v2285 = vpop.f32.mrf.mxu0
      %v2286 = vadd.f32 %v2197, %v2285
      %v2287 = vpop.f32.mrf.mxu0
      %v2288 = vadd.f32 %v2199, %v2287
      %2289 = vmatmul.bf16.gmra.mxu0 %v1164
      %v2290 = vpop.f32.mrf.mxu0
      %v2291 = vadd.f32 %v2202, %v2290
      %v2292 = vpop.f32.mrf.mxu0
      %v2293 = vadd.f32 %v2204, %v2292
      %2294 = vmatmul.bf16.gmra.mxu0 %v1172
      %v2295 = vpop.f32.mrf.mxu0
      %v2296 = vadd.f32 %v2207, %v2295
      %v2297 = vpop.f32.mrf.mxu0
      %v2298 = vadd.f32 %v2209, %v2297
      %2299 = vmatmul.bf16.gmra.mxu0 %v1180
      %v2300 = vpop.f32.mrf.mxu0
      %v2301 = vadd.f32 %v2212, %v2300
      %v2302 = vpop.f32.mrf.mxu0
      %v2303 = vadd.f32 %v2214, %v2302
      %2304 = vmatmul.bf16.gmra.mxu0 %v1188
      %v2305 = vpop.f32.mrf.mxu0
      %v2306 = vadd.f32 %v2217, %v2305
      %v2307 = vpop.f32.mrf.mxu0
      %v2308 = vadd.f32 %v2219, %v2307
      %2309 = vmatmul.bf16.gmra.mxu0 %v1196
      %v2310 = vpop.f32.mrf.mxu0
      %v2311 = vadd.f32 %v2222, %v2310
      %v2312 = vpop.f32.mrf.mxu0
      %v2313 = vadd.f32 %v2224, %v2312
      %2314 = vmatmul.bf16.gmra.mxu0 %v1204
      %v2315 = vpop.f32.mrf.mxu0
      %v2316 = vadd.f32 %v2227, %v2315
      %v2317 = vpop.f32.mrf.mxu0
      %v2318 = vadd.f32 %v2229, %v2317
      %2319 = vmatmul.bf16.gmra.mxu0 %v1212
      %v2320 = vpop.f32.mrf.mxu0
      %v2321 = vadd.f32 %v2232, %v2320
      %v2322 = vpop.f32.mrf.mxu0
      %v2323 = vadd.f32 %v2234, %v2322
      %2324 = vdwg.mxu0
      %2325 = vmatpush.bf16.msra.mxu0 %v513
      %2326 = vmatpush.bf16.msra.mxu0 %v511
      %2327 = vmatpush.bf16.msra.mxu0 %v509
      %2328 = vmatpush.bf16.msra.mxu0 %v507
      %2329 = vmatpush.bf16.msra.mxu0 %v505
      %2330 = vmatpush.bf16.msra.mxu0 %v503
      %2331 = vmatpush.bf16.msra.mxu0 %v501
      %2332 = vmatpush.bf16.msra.mxu0 %v499
      %2333 = vmatmul.bf16.gmra.mxu0 %v1093
      %v2334 = vpop.f32.mrf.mxu0
      %v2335 = vadd.f32 %v2246, %v2334
      %v2336 = vpop.f32.mrf.mxu0
      %v2337 = vadd.f32 %v2248, %v2336
      %2338 = vmatmul.bf16.gmra.mxu0 %v1101
      %v2339 = vpop.f32.mrf.mxu0
      %v2340 = vadd.f32 %v2251, %v2339
      %v2341 = vpop.f32.mrf.mxu0
      %v2342 = vadd.f32 %v2253, %v2341
      %2343 = vmatmul.bf16.gmra.mxu0 %v1109
      %v2344 = vpop.f32.mrf.mxu0
      %v2345 = vadd.f32 %v2256, %v2344
      %v2346 = vpop.f32.mrf.mxu0
      %v2347 = vadd.f32 %v2258, %v2346
      %2348 = vmatmul.bf16.gmra.mxu0 %v1117
      %v2349 = vpop.f32.mrf.mxu0
      %v2350 = vadd.f32 %v2261, %v2349
      %v2351 = vpop.f32.mrf.mxu0
      %v2352 = vadd.f32 %v2263, %v2351
      %2353 = vmatmul.bf16.gmra.mxu0 %v1125
      %v2354 = vpop.f32.mrf.mxu0
      %v2355 = vadd.f32 %v2266, %v2354
      %v2356 = vpop.f32.mrf.mxu0
      %v2357 = vadd.f32 %v2268, %v2356
      %2358 = vmatmul.bf16.gmra.mxu0 %v1133
      %v2359 = vpop.f32.mrf.mxu0
      %v2360 = vadd.f32 %v2271, %v2359
      %v2361 = vpop.f32.mrf.mxu0
      %v2362 = vadd.f32 %v2273, %v2361
      %2363 = vmatmul.bf16.gmra.mxu0 %v1141
      %v2364 = vpop.f32.mrf.mxu0
      %v2365 = vadd.f32 %v2276, %v2364
      %v2366 = vpop.f32.mrf.mxu0
      %v2367 = vadd.f32 %v2278, %v2366
      %2368 = vmatmul.bf16.gmra.mxu0 %v1149
      %v2369 = vpop.f32.mrf.mxu0
      %v2370 = vadd.f32 %v2281, %v2369
      %v2371 = vpop.f32.mrf.mxu0
      %v2372 = vadd.f32 %v2283, %v2371
      %2373 = vmatmul.bf16.gmra.mxu0 %v1157
      %v2374 = vpop.f32.mrf.mxu0
      %v2375 = vadd.f32 %v2286, %v2374
      %v2376 = vpop.f32.mrf.mxu0
      %v2377 = vadd.f32 %v2288, %v2376
      %2378 = vmatmul.bf16.gmra.mxu0 %v1165
      %v2379 = vpop.f32.mrf.mxu0
      %v2380 = vadd.f32 %v2291, %v2379
      %v2381 = vpop.f32.mrf.mxu0
      %v2382 = vadd.f32 %v2293, %v2381
      %2383 = vmatmul.bf16.gmra.mxu0 %v1173
      %v2384 = vpop.f32.mrf.mxu0
      %v2385 = vadd.f32 %v2296, %v2384
      %v2386 = vpop.f32.mrf.mxu0
      %v2387 = vadd.f32 %v2298, %v2386
      %2388 = vmatmul.bf16.gmra.mxu0 %v1181
      %v2389 = vpop.f32.mrf.mxu0
      %v2390 = vadd.f32 %v2301, %v2389
      %v2391 = vpop.f32.mrf.mxu0
      %v2392 = vadd.f32 %v2303, %v2391
      %2393 = vmatmul.bf16.gmra.mxu0 %v1189
      %v2394 = vpop.f32.mrf.mxu0
      %v2395 = vadd.f32 %v2306, %v2394
      %v2396 = vpop.f32.mrf.mxu0
      %v2397 = vadd.f32 %v2308, %v2396
      %2398 = vmatmul.bf16.gmra.mxu0 %v1197
      %v2399 = vpop.f32.mrf.mxu0
      %v2400 = vadd.f32 %v2311, %v2399
      %v2401 = vpop.f32.mrf.mxu0
      %v2402 = vadd.f32 %v2313, %v2401
      %2403 = vmatmul.bf16.gmra.mxu0 %v1205
      %v2404 = vpop.f32.mrf.mxu0
      %v2405 = vadd.f32 %v2316, %v2404
      %v2406 = vpop.f32.mrf.mxu0
      %v2407 = vadd.f32 %v2318, %v2406
      %2408 = vmatmul.bf16.gmra.mxu0 %v1213
      %v2409 = vpop.f32.mrf.mxu0
      %v2410 = vadd.f32 %v2321, %v2409
      %v2411 = vpop.f32.mrf.mxu0
      %v2412 = vadd.f32 %v2323, %v2411
      %2413 = vdwg.mxu0
      %2414 = vmatpush.bf16.msra.mxu0 %v529
      %2415 = vmatpush.bf16.msra.mxu0 %v527
      %2416 = vmatpush.bf16.msra.mxu0 %v525
      %2417 = vmatpush.bf16.msra.mxu0 %v523
      %2418 = vmatpush.bf16.msra.mxu0 %v521
      %2419 = vmatpush.bf16.msra.mxu0 %v519
      %2420 = vmatpush.bf16.msra.mxu0 %v517
      %2421 = vmatpush.bf16.msra.mxu0 %v515
      %2422 = vmatmul.bf16.gmra.mxu0 %v1094
      %v2423 = vpop.f32.mrf.mxu0
      %v2424 = vadd.f32 %v2335, %v2423
      %v2425 = vpop.f32.mrf.mxu0
      %v2426 = vadd.f32 %v2337, %v2425
      %2427 = vmatmul.bf16.gmra.mxu0 %v1102
      %v2428 = vpop.f32.mrf.mxu0
      %v2429 = vadd.f32 %v2340, %v2428
      %v2430 = vpop.f32.mrf.mxu0
      %v2431 = vadd.f32 %v2342, %v2430
      %2432 = vmatmul.bf16.gmra.mxu0 %v1110
      %v2433 = vpop.f32.mrf.mxu0
      %v2434 = vadd.f32 %v2345, %v2433
      %v2435 = vpop.f32.mrf.mxu0
      %v2436 = vadd.f32 %v2347, %v2435
      %2437 = vmatmul.bf16.gmra.mxu0 %v1118
      %v2438 = vpop.f32.mrf.mxu0
      %v2439 = vadd.f32 %v2350, %v2438
      %v2440 = vpop.f32.mrf.mxu0
      %v2441 = vadd.f32 %v2352, %v2440
      %2442 = vmatmul.bf16.gmra.mxu0 %v1126
      %v2443 = vpop.f32.mrf.mxu0
      %v2444 = vadd.f32 %v2355, %v2443
      %v2445 = vpop.f32.mrf.mxu0
      %v2446 = vadd.f32 %v2357, %v2445
      %2447 = vmatmul.bf16.gmra.mxu0 %v1134
      %v2448 = vpop.f32.mrf.mxu0
      %v2449 = vadd.f32 %v2360, %v2448
      %v2450 = vpop.f32.mrf.mxu0
      %v2451 = vadd.f32 %v2362, %v2450
      %2452 = vmatmul.bf16.gmra.mxu0 %v1142
      %v2453 = vpop.f32.mrf.mxu0
      %v2454 = vadd.f32 %v2365, %v2453
      %v2455 = vpop.f32.mrf.mxu0
      %v2456 = vadd.f32 %v2367, %v2455
      %2457 = vmatmul.bf16.gmra.mxu0 %v1150
      %v2458 = vpop.f32.mrf.mxu0
      %v2459 = vadd.f32 %v2370, %v2458
      %v2460 = vpop.f32.mrf.mxu0
      %v2461 = vadd.f32 %v2372, %v2460
      %2462 = vmatmul.bf16.gmra.mxu0 %v1158
      %v2463 = vpop.f32.mrf.mxu0
      %v2464 = vadd.f32 %v2375, %v2463
      %v2465 = vpop.f32.mrf.mxu0
      %v2466 = vadd.f32 %v2377, %v2465
      %2467 = vmatmul.bf16.gmra.mxu0 %v1166
      %v2468 = vpop.f32.mrf.mxu0
      %v2469 = vadd.f32 %v2380, %v2468
      %v2470 = vpop.f32.mrf.mxu0
      %v2471 = vadd.f32 %v2382, %v2470
      %2472 = vmatmul.bf16.gmra.mxu0 %v1174
      %v2473 = vpop.f32.mrf.mxu0
      %v2474 = vadd.f32 %v2385, %v2473
      %v2475 = vpop.f32.mrf.mxu0
      %v2476 = vadd.f32 %v2387, %v2475
      %2477 = vmatmul.bf16.gmra.mxu0 %v1182
      %v2478 = vpop.f32.mrf.mxu0
      %v2479 = vadd.f32 %v2390, %v2478
      %v2480 = vpop.f32.mrf.mxu0
      %v2481 = vadd.f32 %v2392, %v2480
      %2482 = vmatmul.bf16.gmra.mxu0 %v1190
      %v2483 = vpop.f32.mrf.mxu0
      %v2484 = vadd.f32 %v2395, %v2483
      %v2485 = vpop.f32.mrf.mxu0
      %v2486 = vadd.f32 %v2397, %v2485
      %2487 = vmatmul.bf16.gmra.mxu0 %v1198
      %v2488 = vpop.f32.mrf.mxu0
      %v2489 = vadd.f32 %v2400, %v2488
      %v2490 = vpop.f32.mrf.mxu0
      %v2491 = vadd.f32 %v2402, %v2490
      %2492 = vmatmul.bf16.gmra.mxu0 %v1206
      %v2493 = vpop.f32.mrf.mxu0
      %v2494 = vadd.f32 %v2405, %v2493
      %v2495 = vpop.f32.mrf.mxu0
      %v2496 = vadd.f32 %v2407, %v2495
      %2497 = vmatmul.bf16.gmra.mxu0 %v1214
      %v2498 = vpop.f32.mrf.mxu0
      %v2499 = vadd.f32 %v2410, %v2498
      %v2500 = vpop.f32.mrf.mxu0
      %v2501 = vadd.f32 %v2412, %v2500
      %2502 = vdwg.mxu0
      %2503 = vmatpush.bf16.msra.mxu0 %v545
      %2504 = vmatpush.bf16.msra.mxu0 %v543
      %2505 = vmatpush.bf16.msra.mxu0 %v541
      %2506 = vmatpush.bf16.msra.mxu0 %v539
      %2507 = vmatpush.bf16.msra.mxu0 %v537
      %2508 = vmatpush.bf16.msra.mxu0 %v535
      %2509 = vmatpush.bf16.msra.mxu0 %v533
      %2510 = vmatpush.bf16.msra.mxu0 %v531
      %2511 = vmatmul.bf16.gmra.mxu0 %v1095
      %v2512 = vpop.f32.mrf.mxu0
      %v2513 = vadd.f32 %v2424, %v2512
      %v2514 = vpop.f32.mrf.mxu0
      %v2515 = vadd.f32 %v2426, %v2514
      %2516 = vmatmul.bf16.gmra.mxu0 %v1103
      %v2517 = vpop.f32.mrf.mxu0
      %v2518 = vadd.f32 %v2429, %v2517
      %v2519 = vpop.f32.mrf.mxu0
      %v2520 = vadd.f32 %v2431, %v2519
      %2521 = vmatmul.bf16.gmra.mxu0 %v1111
      %v2522 = vpop.f32.mrf.mxu0
      %v2523 = vadd.f32 %v2434, %v2522
      %v2524 = vpop.f32.mrf.mxu0
      %v2525 = vadd.f32 %v2436, %v2524
      %2526 = vmatmul.bf16.gmra.mxu0 %v1119
      %v2527 = vpop.f32.mrf.mxu0
      %v2528 = vadd.f32 %v2439, %v2527
      %v2529 = vpop.f32.mrf.mxu0
      %v2530 = vadd.f32 %v2441, %v2529
      %2531 = vmatmul.bf16.gmra.mxu0 %v1127
      %v2532 = vpop.f32.mrf.mxu0
      %v2533 = vadd.f32 %v2444, %v2532
      %v2534 = vpop.f32.mrf.mxu0
      %v2535 = vadd.f32 %v2446, %v2534
      %2536 = vmatmul.bf16.gmra.mxu0 %v1135
      %v2537 = vpop.f32.mrf.mxu0
      %v2538 = vadd.f32 %v2449, %v2537
      %v2539 = vpop.f32.mrf.mxu0
      %v2540 = vadd.f32 %v2451, %v2539
      %2541 = vmatmul.bf16.gmra.mxu0 %v1143
      %v2542 = vpop.f32.mrf.mxu0
      %v2543 = vadd.f32 %v2454, %v2542
      %v2544 = vpop.f32.mrf.mxu0
      %v2545 = vadd.f32 %v2456, %v2544
      %2546 = vmatmul.bf16.gmra.mxu0 %v1151
      %v2547 = vpop.f32.mrf.mxu0
      %v2548 = vadd.f32 %v2459, %v2547
      %v2549 = vpop.f32.mrf.mxu0
      %v2550 = vadd.f32 %v2461, %v2549
      %2551 = vmatmul.bf16.gmra.mxu0 %v1159
      %v2552 = vpop.f32.mrf.mxu0
      %v2553 = vadd.f32 %v2464, %v2552
      %v2554 = vpop.f32.mrf.mxu0
      %v2555 = vadd.f32 %v2466, %v2554
      %2556 = vmatmul.bf16.gmra.mxu0 %v1167
      %v2557 = vpop.f32.mrf.mxu0
      %v2558 = vadd.f32 %v2469, %v2557
      %v2559 = vpop.f32.mrf.mxu0
      %v2560 = vadd.f32 %v2471, %v2559
      %2561 = vmatmul.bf16.gmra.mxu0 %v1175
      %v2562 = vpop.f32.mrf.mxu0
      %v2563 = vadd.f32 %v2474, %v2562
      %v2564 = vpop.f32.mrf.mxu0
      %v2565 = vadd.f32 %v2476, %v2564
      %2566 = vmatmul.bf16.gmra.mxu0 %v1183
      %v2567 = vpop.f32.mrf.mxu0
      %v2568 = vadd.f32 %v2479, %v2567
      %v2569 = vpop.f32.mrf.mxu0
      %v2570 = vadd.f32 %v2481, %v2569
      %2571 = vmatmul.bf16.gmra.mxu0 %v1191
      %v2572 = vpop.f32.mrf.mxu0
      %v2573 = vadd.f32 %v2484, %v2572
      %v2574 = vpop.f32.mrf.mxu0
      %v2575 = vadd.f32 %v2486, %v2574
      %2576 = vmatmul.bf16.gmra.mxu0 %v1199
      %v2577 = vpop.f32.mrf.mxu0
      %v2578 = vadd.f32 %v2489, %v2577
      %v2579 = vpop.f32.mrf.mxu0
      %v2580 = vadd.f32 %v2491, %v2579
      %2581 = vmatmul.bf16.gmra.mxu0 %v1207
      %v2582 = vpop.f32.mrf.mxu0
      %v2583 = vadd.f32 %v2494, %v2582
      %v2584 = vpop.f32.mrf.mxu0
      %v2585 = vadd.f32 %v2496, %v2584
      %2586 = vmatmul.bf16.gmra.mxu0 %v1215
      %v2587 = vpop.f32.mrf.mxu0
      %v2588 = vadd.f32 %v2499, %v2587
      %v2589 = vpop.f32.mrf.mxu0
      %v2590 = vadd.f32 %v2501, %v2589
      %2591 = vdwg.mxu0
      %2592 = vmatpush.bf16.msra.mxu0 %v561
      %2593 = vmatpush.bf16.msra.mxu0 %v559
      %2594 = vmatpush.bf16.msra.mxu0 %v557
      %2595 = vmatpush.bf16.msra.mxu0 %v555
      %2596 = vmatpush.bf16.msra.mxu0 %v553
      %2597 = vmatpush.bf16.msra.mxu0 %v551
      %2598 = vmatpush.bf16.msra.mxu0 %v549
      %2599 = vmatpush.bf16.msra.mxu0 %v547
      %2600 = vmatmul.bf16.gmra.mxu0 %v1096
      %v2601 = vpop.f32.mrf.mxu0
      %v2602 = vadd.f32 %v2513, %v2601
      %v2603 = vpop.f32.mrf.mxu0
      %v2604 = vadd.f32 %v2515, %v2603
      %2605 = vmatmul.bf16.gmra.mxu0 %v1104
      %v2606 = vpop.f32.mrf.mxu0
      %v2607 = vadd.f32 %v2518, %v2606
      %v2608 = vpop.f32.mrf.mxu0
      %v2609 = vadd.f32 %v2520, %v2608
      %2610 = vmatmul.bf16.gmra.mxu0 %v1112
      %v2611 = vpop.f32.mrf.mxu0
      %v2612 = vadd.f32 %v2523, %v2611
      %v2613 = vpop.f32.mrf.mxu0
      %v2614 = vadd.f32 %v2525, %v2613
      %2615 = vmatmul.bf16.gmra.mxu0 %v1120
      %v2616 = vpop.f32.mrf.mxu0
      %v2617 = vadd.f32 %v2528, %v2616
      %v2618 = vpop.f32.mrf.mxu0
      %v2619 = vadd.f32 %v2530, %v2618
      %2620 = vmatmul.bf16.gmra.mxu0 %v1128
      %v2621 = vpop.f32.mrf.mxu0
      %v2622 = vadd.f32 %v2533, %v2621
      %v2623 = vpop.f32.mrf.mxu0
      %v2624 = vadd.f32 %v2535, %v2623
      %2625 = vmatmul.bf16.gmra.mxu0 %v1136
      %v2626 = vpop.f32.mrf.mxu0
      %v2627 = vadd.f32 %v2538, %v2626
      %v2628 = vpop.f32.mrf.mxu0
      %v2629 = vadd.f32 %v2540, %v2628
      %2630 = vmatmul.bf16.gmra.mxu0 %v1144
      %v2631 = vpop.f32.mrf.mxu0
      %v2632 = vadd.f32 %v2543, %v2631
      %v2633 = vpop.f32.mrf.mxu0
      %v2634 = vadd.f32 %v2545, %v2633
      %2635 = vmatmul.bf16.gmra.mxu0 %v1152
      %v2636 = vpop.f32.mrf.mxu0
      %v2637 = vadd.f32 %v2548, %v2636
      %v2638 = vpop.f32.mrf.mxu0
      %v2639 = vadd.f32 %v2550, %v2638
      %2640 = vmatmul.bf16.gmra.mxu0 %v1160
      %v2641 = vpop.f32.mrf.mxu0
      %v2642 = vadd.f32 %v2553, %v2641
      %v2643 = vpop.f32.mrf.mxu0
      %v2644 = vadd.f32 %v2555, %v2643
      %2645 = vmatmul.bf16.gmra.mxu0 %v1168
      %v2646 = vpop.f32.mrf.mxu0
      %v2647 = vadd.f32 %v2558, %v2646
      %v2648 = vpop.f32.mrf.mxu0
      %v2649 = vadd.f32 %v2560, %v2648
      %2650 = vmatmul.bf16.gmra.mxu0 %v1176
      %v2651 = vpop.f32.mrf.mxu0
      %v2652 = vadd.f32 %v2563, %v2651
      %v2653 = vpop.f32.mrf.mxu0
      %v2654 = vadd.f32 %v2565, %v2653
      %2655 = vmatmul.bf16.gmra.mxu0 %v1184
      %v2656 = vpop.f32.mrf.mxu0
      %v2657 = vadd.f32 %v2568, %v2656
      %v2658 = vpop.f32.mrf.mxu0
      %v2659 = vadd.f32 %v2570, %v2658
      %2660 = vmatmul.bf16.gmra.mxu0 %v1192
      %v2661 = vpop.f32.mrf.mxu0
      %v2662 = vadd.f32 %v2573, %v2661
      %v2663 = vpop.f32.mrf.mxu0
      %v2664 = vadd.f32 %v2575, %v2663
      %2665 = vmatmul.bf16.gmra.mxu0 %v1200
      %v2666 = vpop.f32.mrf.mxu0
      %v2667 = vadd.f32 %v2578, %v2666
      %v2668 = vpop.f32.mrf.mxu0
      %v2669 = vadd.f32 %v2580, %v2668
      %2670 = vmatmul.bf16.gmra.mxu0 %v1208
      %v2671 = vpop.f32.mrf.mxu0
      %v2672 = vadd.f32 %v2583, %v2671
      %v2673 = vpop.f32.mrf.mxu0
      %v2674 = vadd.f32 %v2585, %v2673
      %2675 = vmatmul.bf16.gmra.mxu0 %v1216
      %v2676 = vpop.f32.mrf.mxu0
      %v2677 = vadd.f32 %v2588, %v2676
      %v2678 = vpop.f32.mrf.mxu0
      %v2679 = vadd.f32 %v2590, %v2678
      %2680 = vdwg.mxu0
      %2681 = vmatpush.bf16.msra.mxu0 %v577
      %2682 = vmatpush.bf16.msra.mxu0 %v575
      %2683 = vmatpush.bf16.msra.mxu0 %v573
      %2684 = vmatpush.bf16.msra.mxu0 %v571
      %2685 = vmatpush.bf16.msra.mxu0 %v569
      %2686 = vmatpush.bf16.msra.mxu0 %v567
      %2687 = vmatpush.bf16.msra.mxu0 %v565
      %2688 = vmatpush.bf16.msra.mxu0 %v563
      %2689 = vmatmul.bf16.gmra.mxu0 %v1097
      %v2690 = vpop.f32.mrf.mxu0
      %v2691 = vadd.f32 %v2602, %v2690
      %v2692 = vpop.f32.mrf.mxu0
      %v2693 = vadd.f32 %v2604, %v2692
      %2694 = vmatmul.bf16.gmra.mxu0 %v1105
      %v2695 = vpop.f32.mrf.mxu0
      %v2696 = vadd.f32 %v2607, %v2695
      %v2697 = vpop.f32.mrf.mxu0
      %v2698 = vadd.f32 %v2609, %v2697
      %2699 = vmatmul.bf16.gmra.mxu0 %v1113
      %v2700 = vpop.f32.mrf.mxu0
      %v2701 = vadd.f32 %v2612, %v2700
      %v2702 = vpop.f32.mrf.mxu0
      %v2703 = vadd.f32 %v2614, %v2702
      %2704 = vmatmul.bf16.gmra.mxu0 %v1121
      %v2705 = vpop.f32.mrf.mxu0
      %v2706 = vadd.f32 %v2617, %v2705
      %v2707 = vpop.f32.mrf.mxu0
      %v2708 = vadd.f32 %v2619, %v2707
      %2709 = vmatmul.bf16.gmra.mxu0 %v1129
      %v2710 = vpop.f32.mrf.mxu0
      %v2711 = vadd.f32 %v2622, %v2710
      %v2712 = vpop.f32.mrf.mxu0
      %v2713 = vadd.f32 %v2624, %v2712
      %2714 = vmatmul.bf16.gmra.mxu0 %v1137
      %v2715 = vpop.f32.mrf.mxu0
      %v2716 = vadd.f32 %v2627, %v2715
      %v2717 = vpop.f32.mrf.mxu0
      %v2718 = vadd.f32 %v2629, %v2717
      %2719 = vmatmul.bf16.gmra.mxu0 %v1145
      %v2720 = vpop.f32.mrf.mxu0
      %v2721 = vadd.f32 %v2632, %v2720
      %v2722 = vpop.f32.mrf.mxu0
      %v2723 = vadd.f32 %v2634, %v2722
      %2724 = vmatmul.bf16.gmra.mxu0 %v1153
      %v2725 = vpop.f32.mrf.mxu0
      %v2726 = vadd.f32 %v2637, %v2725
      %v2727 = vpop.f32.mrf.mxu0
      %v2728 = vadd.f32 %v2639, %v2727
      %2729 = vmatmul.bf16.gmra.mxu0 %v1161
      %v2730 = vpop.f32.mrf.mxu0
      %v2731 = vadd.f32 %v2642, %v2730
      %v2732 = vpop.f32.mrf.mxu0
      %v2733 = vadd.f32 %v2644, %v2732
      %2734 = vmatmul.bf16.gmra.mxu0 %v1169
      %v2735 = vpop.f32.mrf.mxu0
      %v2736 = vadd.f32 %v2647, %v2735
      %v2737 = vpop.f32.mrf.mxu0
      %v2738 = vadd.f32 %v2649, %v2737
      %2739 = vmatmul.bf16.gmra.mxu0 %v1177
      %v2740 = vpop.f32.mrf.mxu0
      %v2741 = vadd.f32 %v2652, %v2740
      %v2742 = vpop.f32.mrf.mxu0
      %v2743 = vadd.f32 %v2654, %v2742
      %2744 = vmatmul.bf16.gmra.mxu0 %v1185
      %v2745 = vpop.f32.mrf.mxu0
      %v2746 = vadd.f32 %v2657, %v2745
      %v2747 = vpop.f32.mrf.mxu0
      %v2748 = vadd.f32 %v2659, %v2747
      %2749 = vmatmul.bf16.gmra.mxu0 %v1193
      %v2750 = vpop.f32.mrf.mxu0
      %v2751 = vadd.f32 %v2662, %v2750
      %v2752 = vpop.f32.mrf.mxu0
      %v2753 = vadd.f32 %v2664, %v2752
      %2754 = vmatmul.bf16.gmra.mxu0 %v1201
      %v2755 = vpop.f32.mrf.mxu0
      %v2756 = vadd.f32 %v2667, %v2755
      %v2757 = vpop.f32.mrf.mxu0
      %v2758 = vadd.f32 %v2669, %v2757
      %2759 = vmatmul.bf16.gmra.mxu0 %v1209
      %v2760 = vpop.f32.mrf.mxu0
      %v2761 = vadd.f32 %v2672, %v2760
      %v2762 = vpop.f32.mrf.mxu0
      %v2763 = vadd.f32 %v2674, %v2762
      %2764 = vmatmul.bf16.gmra.mxu0 %v1217
      %v2765 = vpop.f32.mrf.mxu0
      %v2766 = vadd.f32 %v2677, %v2765
      %v2767 = vpop.f32.mrf.mxu0
      %v2768 = vadd.f32 %v2679, %v2767
      %2769 = vdwg.mxu0
      %2770 = vst [vmem:[%s192] sm:$0xff] %v1979
      %vm2771 = vcmask 556032
      %2772 = vst.msk [vmem:[%s192 + $0x8] sm:$0xff] %vm2771, %v2691
      %2773 = vst [vmem:[%s192 + $0x10] sm:$0xff] %v1981
      %2774 = vst.msk [vmem:[%s192 + $0x18] sm:$0xff] %vm2771, %v2693
      %2775 = vst [vmem:[%s192 + $0x20] sm:$0xff] %v1984
      %2776 = vst.msk [vmem:[%s192 + $0x28] sm:$0xff] %vm2771, %v2696
      %2777 = vst [vmem:[%s192 + $0x30] sm:$0xff] %v1986
      %2778 = vst.msk [vmem:[%s192 + $0x38] sm:$0xff] %vm2771, %v2698
      %2779 = vst [vmem:[%s192 + $0x40] sm:$0xff] %v1989
      %2780 = vst.msk [vmem:[%s192 + $0x48] sm:$0xff] %vm2771, %v2701
      %2781 = vst [vmem:[%s192 + $0x50] sm:$0xff] %v1991
      %2782 = vst.msk [vmem:[%s192 + $0x58] sm:$0xff] %vm2771, %v2703
      %2783 = vst [vmem:[%s192 + $0x60] sm:$0xff] %v1994
      %2784 = vst.msk [vmem:[%s192 + $0x68] sm:$0xff] %vm2771, %v2706
      %2785 = vst [vmem:[%s192 + $0x70] sm:$0xff] %v1996
      %2786 = vst.msk [vmem:[%s192 + $0x78] sm:$0xff] %vm2771, %v2708
      %2787 = vst [vmem:[%s192 + $0x80] sm:$0xff] %v1999
      %2788 = vst.msk [vmem:[%s192 + $0x88] sm:$0xff] %vm2771, %v2711
      %2789 = vst [vmem:[%s192 + $0x90] sm:$0xff] %v2001
      %2790 = vst.msk [vmem:[%s192 + $0x98] sm:$0xff] %vm2771, %v2713
      %2791 = vst [vmem:[%s192 + $0xa0] sm:$0xff] %v2004
      %2792 = vst.msk [vmem:[%s192 + $0xa8] sm:$0xff] %vm2771, %v2716
      %2793 = vst [vmem:[%s192 + $0xb0] sm:$0xff] %v2006
      %2794 = vst.msk [vmem:[%s192 + $0xb8] sm:$0xff] %vm2771, %v2718
      %2795 = vst [vmem:[%s192 + $0xc0] sm:$0xff] %v2009
      %2796 = vst.msk [vmem:[%s192 + $0xc8] sm:$0xff] %vm2771, %v2721
      %2797 = vst [vmem:[%s192 + $0xd0] sm:$0xff] %v2011
      %2798 = vst.msk [vmem:[%s192 + $0xd8] sm:$0xff] %vm2771, %v2723
      %2799 = vst [vmem:[%s192 + $0xe0] sm:$0xff] %v2014
      %2800 = vst.msk [vmem:[%s192 + $0xe8] sm:$0xff] %vm2771, %v2726
      %2801 = vst [vmem:[%s192 + $0xf0] sm:$0xff] %v2016
      %2802 = vst.msk [vmem:[%s192 + $0xf8] sm:$0xff] %vm2771, %v2728
      %2803 = vst [vmem:[%s192 + $0x100] sm:$0xff] %v2019
      %2804 = vst.msk [vmem:[%s192 + $0x108] sm:$0xff] %vm2771, %v2731
      %2805 = vst [vmem:[%s192 + $0x110] sm:$0xff] %v2021
      %2806 = vst.msk [vmem:[%s192 + $0x118] sm:$0xff] %vm2771, %v2733
      %2807 = vst [vmem:[%s192 + $0x120] sm:$0xff] %v2024
      %2808 = vst.msk [vmem:[%s192 + $0x128] sm:$0xff] %vm2771, %v2736
      %2809 = vst [vmem:[%s192 + $0x130] sm:$0xff] %v2026
      %2810 = vst.msk [vmem:[%s192 + $0x138] sm:$0xff] %vm2771, %v2738
      %2811 = vst [vmem:[%s192 + $0x140] sm:$0xff] %v2029
      %2812 = vst.msk [vmem:[%s192 + $0x148] sm:$0xff] %vm2771, %v2741
      %2813 = vst [vmem:[%s192 + $0x150] sm:$0xff] %v2031
      %2814 = vst.msk [vmem:[%s192 + $0x158] sm:$0xff] %vm2771, %v2743
      %2815 = vst [vmem:[%s192 + $0x160] sm:$0xff] %v2034
      %2816 = vst.msk [vmem:[%s192 + $0x168] sm:$0xff] %vm2771, %v2746
      %2817 = vst [vmem:[%s192 + $0x170] sm:$0xff] %v2036
      %2818 = vst.msk [vmem:[%s192 + $0x178] sm:$0xff] %vm2771, %v2748
      %2819 = vst [vmem:[%s192 + $0x180] sm:$0xff] %v2039
      %2820 = vst.msk [vmem:[%s192 + $0x188] sm:$0xff] %vm2771, %v2751
      %2821 = vst [vmem:[%s192 + $0x190] sm:$0xff] %v2041
      %2822 = vst.msk [vmem:[%s192 + $0x198] sm:$0xff] %vm2771, %v2753
      %2823 = vst [vmem:[%s192 + $0x1a0] sm:$0xff] %v2044
      %2824 = vst.msk [vmem:[%s192 + $0x1a8] sm:$0xff] %vm2771, %v2756
      %2825 = vst [vmem:[%s192 + $0x1b0] sm:$0xff] %v2046
      %2826 = vst.msk [vmem:[%s192 + $0x1b8] sm:$0xff] %vm2771, %v2758
      %2827 = vst [vmem:[%s192 + $0x1c0] sm:$0xff] %v2049
      %2828 = vst.msk [vmem:[%s192 + $0x1c8] sm:$0xff] %vm2771, %v2761
      %2829 = vst [vmem:[%s192 + $0x1d0] sm:$0xff] %v2051
      %2830 = vst.msk [vmem:[%s192 + $0x1d8] sm:$0xff] %vm2771, %v2763
      %2831 = vst [vmem:[%s192 + $0x1e0] sm:$0xff] %v2054
      %2832 = vst.msk [vmem:[%s192 + $0x1e8] sm:$0xff] %vm2771, %v2766
      %2833 = vst [vmem:[%s192 + $0x1f0] sm:$0xff] %v2056
      %2834 = vst.msk [vmem:[%s192 + $0x1f8] sm:$0xff] %vm2771, %v2768
      %s2835 = smul.u32 32, %s18
      %p2836 = scmp.lt.s32.totalorder %s17, 0
      %s2837 = scalar_select %p2836, %s17, 0
      %p2838 = scmp.lt.s32.totalorder %s2835, 63
      %s2839 = scalar_select %p2838, %s2835, 63
      %s2840 = smul.addr %s2839, 2
      %s2841 = smul.addr %s2837, 128
      %s2842 = sadd.s32 %s2840, %s2841
      %s2843 = smul.addr %s2842, 8
      %s2844 = scalar_lea.vmem %s2, %s2843
      // Predicated region
      $region29: #{tpu_custom_call.1} parent=27 // pred_check
        %p2845 = pneg %p97
      $region30: #{tpu_custom_call.1} parent=27 // pred_check_branch
        %2847 = sbr.rel (%p2845) target = $region32
      $region31: #{tpu_custom_call.1} parent=27 // pred_region
        %s2848 = smul.u32 32, %s18
      $region32: #{tpu_custom_call.1} parent=27 // pred_fallthru
        _
    $region28: #{tpu_custom_call.1} parent=5 // pred_fallthru
      _
    %p2849 = scmp.le.s32.totalorder 2, %s8
    // Predicated region
    $region33: #{tpu_custom_call.1} parent=5 // pred_check
      %p2850 = pneg %p2849
    $region34: #{tpu_custom_call.1} parent=5 // pred_check_branch
      %2852 = sbr.rel (%p2850) target = $region36
    $region35: #{tpu_custom_call.1} parent=5 // pred_region
      %s2853 = ssub.s32 %s8, 2
      // Predicated region
      $region37: #{tpu_custom_call.1} parent=35 // pred_check
        %p2854 = pneg %p103
      $region38: #{tpu_custom_call.1} parent=35 // pred_check_branch
        %2856 = sbr.rel (%p2854) target = $region40
      $region39: #{tpu_custom_call.1} parent=35 // pred_region
        %s2857 = smul.u32 32, %s20
        %p2858 = scmp.lt.s32.totalorder %s19, 0
        %s2859 = scalar_select %p2858, %s19, 0
        %p2860 = scmp.lt.s32.totalorder %s2857, 63
        %s2861 = scalar_select %p2860, %s2857, 63
        %s2862 = smul.addr %s2861, 2
        %s2863 = smul.addr %s2859, 128
        %s2864 = sadd.s32 %s2862, %s2863
        %s2865 = smul.addr %s2864, 8
        %s2866 = scalar_lea.vmem %s2, %s2865
      $region40: #{tpu_custom_call.1} parent=35 // pred_fallthru
        _
    $region36: #{tpu_custom_call.1} parent=5 // pred_fallthru
      _
  $region6: #{tpu_custom_call.1} parent=0 // loop_footer
    %s12 = sadd.s32 1, %s8
  $region7: #{tpu_custom_call.1} parent=0 // loop_footer_branch
    %7 = sbr.rel target = $region3
  $region8: #{tpu_custom_call.1} parent=0 // loop_exit
    _

</llo_original>
